<compile_context>
chip_gen: v5e
topology: v5e:2x2
jax: 0.10.0
libtpu: 0.0.40
codegen_flags: <defaults>
</compile_context>

<pallas_src>
from functools import partial

import jax
import jax.numpy as jnp
from jax.experimental import pallas as pl
from jax.experimental.pallas import tpu as pltpu

# ---- model dimensions (small test sizes consistent with the module) ----
IN_SIZE = 16          # input_size
HIDDEN = 32           # hidden_size / embedding_dim
OUTPUT = 4            # output_size
KCONV = 4             # sLSTM conv1d kernel size
NGATES = 4            # i, f, z, o
UP = 64               # gated-FFN up dim: round_up(1.3 * 32, 64)
LN_EPS = 1e-5
LANES = 128

assert NGATES * HIDDEN == LANES and 2 * UP == LANES

# ---- packed weight-slab row offsets (lane width = 128) ----
WX_R = 0              # 32 rows : [Wi.T | Wf.T | Wz.T | Wo.T]            (H, 4H)
RR_R = 32             # 32 rows : [Ri.T | Rf.T | Rz.T | Ro.T]            (H, 4H)
FUP_R = 64            # 32 rows : FFN proj_up.T                          (H, 2*UP)
FDN_R = 96            # 64 rows : FFN proj_down.T  (cols 0:H)            (UP, H)
EMB_R = 160           # 16 rows : embedding weight.T (cols 0:H)          (IN, H)
FC_R = 176            # 32 rows : fc weight.T        (cols 0:OUT)        (H, OUT)
CONV_R = 208          #  4 rows : depthwise conv taps (cols 0:H)         (K, H)
VEC_R = 216           #  8 rows : emb_b, ln1_g, conv_b, cell_b(4H), gn_g, ln2_g, post_ln_g, fc_b
SLAB_ROWS = 224


def xlstm_kernel(x_ref, w_ref, out_ref, xpad_scr, gx_scr, *, batch, seq_len):
    f32 = jnp.float32
    H = HIDDEN
    B, S = batch, seq_len
    NB = B * S

    def _sigmoid(v):
        return 1.0 / (1.0 + jnp.exp(-v))

    def _log_sigmoid(v):
        # stable log(sigmoid(v)) built only from exp/log (safe Mosaic lowerings)
        return jnp.minimum(v, 0.0) - jnp.log(1.0 + jnp.exp(-jnp.abs(v)))

    def _layernorm(v, gamma):            # weight-only LayerNorm (xlstm style)
        mu = jnp.mean(v, axis=-1, keepdims=True)
        var = jnp.mean((v - mu) ** 2, axis=-1, keepdims=True)
        return (v - mu) * jax.lax.rsqrt(var + LN_EPS) * gamma

    # ---- embedding: one fused (S*B, IN) @ (IN, H) matmul ----
    x2d = x_ref[...].astype(f32)                                             # (NB, IN), time-major
    h_emb = jnp.dot(x2d, w_ref[EMB_R:EMB_R + IN_SIZE, 0:H],
                    preferred_element_type=f32) + w_ref[VEC_R + 0:VEC_R + 1, 0:H]   # (NB, H)

    # ---- sLSTM block pre-norm ----
    xn = _layernorm(h_emb, w_ref[VEC_R + 1:VEC_R + 2, 0:H])                  # (NB, H)

    # ---- causal depthwise conv1d (K taps) + swish (i/f gate path) ----
    # time-major rows: shifting by one timestep == shifting by B rows.
    pad_rows = (KCONV - 1) * B
    xpad_scr[0:pad_rows, :] = jnp.zeros((pad_rows, H), f32)
    xpad_scr[pad_rows:pad_rows + NB, :] = xn
    w_conv = w_ref[CONV_R:CONV_R + KCONV, 0:H]                               # (K, H)
    conv = w_ref[VEC_R + 2:VEC_R + 3, 0:H]                                   # conv bias (1, H)
    for k in range(KCONV):
        conv = conv + xpad_scr[k * B:k * B + NB, :] * w_conv[k:k + 1, :]
    xconv = conv * _sigmoid(conv)                                            # swish, (NB, H)

    # ---- x-side gate pre-activations: two fused matmuls over all timesteps ----
    gx_scr[:, 0:2 * H] = jnp.dot(xconv, w_ref[WX_R:WX_R + H, 0:2 * H],
                                 preferred_element_type=f32)                 # i, f
    gx_scr[:, 2 * H:4 * H] = jnp.dot(xn, w_ref[WX_R:WX_R + H, 2 * H:4 * H],
                                     preferred_element_type=f32)             # z, o

    # ---- sLSTM recurrence: exponential gating with stabilizer state ----
    w_rec = w_ref[RR_R:RR_R + H, :]                                          # (H, 4H)
    b_cell = w_ref[VEC_R + 3:VEC_R + 4, :]                                   # (1, 4H)
    y = jnp.zeros((B, H), f32)
    c = jnp.zeros((B, H), f32)
    n = jnp.zeros((B, H), f32)
    m = jnp.zeros((B, H), f32)
    for t in range(S):                                   # static unroll (S is small & static)
        raw = (gx_scr[t * B:(t + 1) * B, :]
               + jnp.dot(y, w_rec, preferred_element_type=f32) + b_cell)     # (B, 4H)
        i_r = raw[:, 0:H]
        f_r = raw[:, H:2 * H]
        z_r = raw[:, 2 * H:3 * H]
        o_r = raw[:, 3 * H:4 * H]
        logfplusm = m + _log_sigmoid(f_r)
        m_new = jnp.maximum(i_r, logfplusm)
        i_g = jnp.exp(i_r - m_new)
        f_g = jnp.exp(logfplusm - m_new)
        c = f_g * c + i_g * jnp.tanh(z_r)
        n = f_g * n + i_g
        m = m_new
        y = _sigmoid(o_r) * c / n

    # only the last timestep reaches the model output -> run the pointwise tail on (B, H)
    y_gn = _layernorm(y, w_ref[VEC_R + 4:VEC_R + 5, 0:H])                    # 1-head group norm
    h = h_emb[(S - 1) * B:S * B, :] + y_gn                                   # residual 1

    # ---- gated feed-forward (GELU gate) ----
    h_n = _layernorm(h, w_ref[VEC_R + 5:VEC_R + 6, 0:H])
    up = jnp.dot(h_n, w_ref[FUP_R:FUP_R + H, :], preferred_element_type=f32) # (B, 2*UP)
    # TODO(synk): PyTorch F.gelu default is exact (erf); tanh approximation used here.
    gate = jax.nn.gelu(up[:, 0:UP], approximate=True)
    ff = jnp.dot(gate * up[:, UP:2 * UP], w_ref[FDN_R:FDN_R + UP, 0:H],
                 preferred_element_type=f32)                                 # (B, H)
    h = h + ff                                                               # residual 2

    # ---- post-blocks LayerNorm + final Linear ----
    h = _layernorm(h, w_ref[VEC_R + 6:VEC_R + 7, 0:H])
    out = (jnp.dot(h, w_ref[FC_R:FC_R + H, 0:OUTPUT], preferred_element_type=f32)
           + w_ref[VEC_R + 7:VEC_R + 8, 0:OUTPUT])
    out_ref[...] = out.astype(out_ref.dtype)


def xlstm_forward(x, slab):
    B, S, IN = x.shape
    assert IN == IN_SIZE
    NB = B * S
    # time-major flatten (host-side XLA op) so each timestep is a contiguous row block
    x2d = jnp.transpose(x, (1, 0, 2)).reshape(NB, IN)
    kernel = partial(xlstm_kernel, batch=B, seq_len=S)
    return pl.pallas_call(
        kernel,
        out_shape=jax.ShapeDtypeStruct((B, OUTPUT), jnp.float32),
        grid=(1,),
        in_specs=[
            pl.BlockSpec((NB, IN_SIZE), lambda i: (0, 0)),
            pl.BlockSpec((SLAB_ROWS, LANES), lambda i: (0, 0)),
        ],
        out_specs=pl.BlockSpec((B, OUTPUT), lambda i: (0, 0)),
        scratch_shapes=[
            pltpu.VMEM(((S + KCONV - 1) * B, HIDDEN), jnp.float32),   # zero-padded x_norm (conv)
            pltpu.VMEM((NB, NGATES * HIDDEN), jnp.float32),           # x-side gate pre-acts
        ],
        compiler_params=pltpu.CompilerParams(dimension_semantics=("arbitrary",)),
    )(x2d, slab)


def init_params(key):
    H, IN, K, O = HIDDEN, IN_SIZE, KCONV, OUTPUT
    ks = jax.random.split(key, 14)
    nrm = lambda k, shp, s=0.1: jax.random.normal(k, shp, jnp.float32) * s
    return {
        'w_emb': nrm(ks[0], (H, IN)), 'b_emb': jnp.zeros((H,), jnp.float32),
        'ln1_g': jnp.ones((H,), jnp.float32),
        'w_conv': nrm(ks[1], (H, K)), 'b_conv': jnp.zeros((H,), jnp.float32),
        'w_i': nrm(ks[2], (H, H)), 'w_f': nrm(ks[3], (H, H)),
        'w_z': nrm(ks[4], (H, H)), 'w_o': nrm(ks[5], (H, H)),
        'r_i': nrm(ks[6], (H, H), 0.05), 'r_f': nrm(ks[7], (H, H), 0.05),
        'r_z': nrm(ks[8], (H, H), 0.05), 'r_o': nrm(ks[9], (H, H), 0.05),
        'b_i': jnp.zeros((H,), jnp.float32),
        # stand-in for the powerlaw_blockdependent forget-gate bias init
        'b_f': jnp.linspace(3.0, 6.0, H, dtype=jnp.float32),
        'b_z': jnp.zeros((H,), jnp.float32), 'b_o': jnp.zeros((H,), jnp.float32),
        'gn_g': jnp.ones((H,), jnp.float32), 'ln2_g': jnp.ones((H,), jnp.float32),
        'w_up': nrm(ks[10], (2 * UP, H)), 'w_dn': nrm(ks[11], (H, UP)),
        'pn_g': jnp.ones((H,), jnp.float32),
        'w_fc': nrm(ks[12], (O, H)), 'b_fc': nrm(ks[13], (O,), 0.05),
    }


def pack_params(p):
    """Coalesce every weight/bias into one lane-aligned (224, 128) f32 slab (single DMA)."""
    H = HIDDEN
    slab = jnp.zeros((SLAB_ROWS, LANES), jnp.float32)
    w_gx = jnp.concatenate([p['w_i'].T, p['w_f'].T, p['w_z'].T, p['w_o'].T], axis=1)  # (H, 4H)
    w_rr = jnp.concatenate([p['r_i'].T, p['r_f'].T, p['r_z'].T, p['r_o'].T], axis=1)  # (H, 4H)
    slab = slab.at[WX_R:WX_R + H, :].set(w_gx)
    slab = slab.at[RR_R:RR_R + H, :].set(w_rr)
    slab = slab.at[FUP_R:FUP_R + H, :].set(p['w_up'].T)
    slab = slab.at[FDN_R:FDN_R + UP, 0:H].set(p['w_dn'].T)
    slab = slab.at[EMB_R:EMB_R + IN_SIZE, 0:H].set(p['w_emb'].T)
    slab = slab.at[FC_R:FC_R + H, 0:OUTPUT].set(p['w_fc'].T)
    slab = slab.at[CONV_R:CONV_R + KCONV, 0:H].set(p['w_conv'].T)
    slab = slab.at[VEC_R + 0, 0:H].set(p['b_emb'])
    slab = slab.at[VEC_R + 1, 0:H].set(p['ln1_g'])
    slab = slab.at[VEC_R + 2, 0:H].set(p['b_conv'])
    slab = slab.at[VEC_R + 3, :].set(jnp.concatenate([p['b_i'], p['b_f'], p['b_z'], p['b_o']]))
    slab = slab.at[VEC_R + 4, 0:H].set(p['gn_g'])
    slab = slab.at[VEC_R + 5, 0:H].set(p['ln2_g'])
    slab = slab.at[VEC_R + 6, 0:H].set(p['pn_g'])
    slab = slab.at[VEC_R + 7, 0:OUTPUT].set(p['b_fc'])
    return slab


if __name__ == "__main__":
    key = jax.random.PRNGKey(0)
    kx, kp = jax.random.split(key)
    B, S = 2, 8
    x = jax.random.normal(kx, (B, S, IN_SIZE), jnp.float32)
    params = init_params(kp)
    slab = pack_params(params)

    out = xlstm_forward(x, slab)
    out = jax.block_until_ready(out)
    assert out.shape == (B, OUTPUT), out.shape
    assert bool(jnp.all(jnp.isfinite(out)))
    print("KERNEL_OK")
</pallas_src>

<mosaic_0001>
module attributes {stable_mosaic.version = 11 : i64} {
  func.func @xlstm_kernel(%arg0: i32, %arg1: memref<16x16xf32, #tpu.memory_space<vmem>>, %arg2: memref<224x128xf32, #tpu.memory_space<vmem>>, %arg3: memref<2x4xf32, #tpu.memory_space<vmem>>, %arg4: memref<22x32xf32, #tpu.memory_space<vmem>>, %arg5: memref<16x128xf32, #tpu.memory_space<vmem>>) attributes {dimension_semantics = [#tpu.dimension_semantics<arbitrary>], iteration_bounds = array<i64: 1>, scalar_prefetch = 0 : i64, scratch_operands = 2 : i64, tpu.core_type = #tpu.core_type<tc>, window_params = [{pipeline_mode = #tpu.pipeline_mode<synchronous>, transform_indices = @transform_0, window_bounds = array<i64: 16, 16>}, {pipeline_mode = #tpu.pipeline_mode<synchronous>, transform_indices = @transform_1, window_bounds = array<i64: 224, 128>}, {pipeline_mode = #tpu.pipeline_mode<synchronous>, transform_indices = @transform_2, window_bounds = array<i64: 2, 4>}]} {
    %c0 = arith.constant 0 : index
    %c0_0 = arith.constant 0 : index
    %0 = vector.load %arg1[%c0, %c0_0] : memref<16x16xf32, #tpu.memory_space<vmem>>, vector<16x16xf32>
    %c160 = arith.constant 160 : index
    %c0_1 = arith.constant 0 : index
    %1 = vector.load %arg2[%c160, %c0_1] : memref<224x128xf32, #tpu.memory_space<vmem>>, vector<16x32xf32>
    %cst = arith.constant dense<0.000000e+00> : vector<16x32xf32>
    %2 = tpu.matmul %0, %1, %cst {dimension_numbers = #tpu.dot_dimension_numbers<[1], [0], [0], [1], [0, 0, 1, 1], [], []>} : vector<16x16xf32>, vector<16x32xf32>, vector<16x32xf32> -> vector<16x32xf32>
    %c216 = arith.constant 216 : index
    %c0_2 = arith.constant 0 : index
    %3 = vector.load %arg2[%c216, %c0_2] : memref<224x128xf32, #tpu.memory_space<vmem>>, vector<1x32xf32>
    %4 = vector.broadcast %3 : vector<1x32xf32> to vector<16x32xf32>
    %5 = arith.addf %2, %4 : vector<16x32xf32>
    %c217 = arith.constant 217 : index
    %c0_3 = arith.constant 0 : index
    %6 = vector.load %arg2[%c217, %c0_3] : memref<224x128xf32, #tpu.memory_space<vmem>>, vector<1x32xf32>
    %cst_4 = arith.constant dense<0.000000e+00> : vector<16xf32>
    %7 = vector.multi_reduction <add>, %5, %cst_4 [1] : vector<16x32xf32> to vector<16xf32>
    %8 = vector.shape_cast %7 : vector<16xf32> to vector<16x1xf32>
    %cst_5 = arith.constant 3.200000e+01 : f32
    %9 = vector.broadcast %cst_5 : f32 to vector<16x1xf32>
    %10 = arith.divf %8, %9 : vector<16x1xf32>
    %11 = vector.broadcast %10 : vector<16x1xf32> to vector<16x32xf32>
    %12 = arith.subf %5, %11 : vector<16x32xf32>
    %13 = arith.mulf %12, %12 : vector<16x32xf32>
    %cst_6 = arith.constant dense<0.000000e+00> : vector<16xf32>
    %14 = vector.multi_reduction <add>, %13, %cst_6 [1] : vector<16x32xf32> to vector<16xf32>
    %15 = vector.shape_cast %14 : vector<16xf32> to vector<16x1xf32>
    %cst_7 = arith.constant 3.200000e+01 : f32
    %16 = vector.broadcast %cst_7 : f32 to vector<16x1xf32>
    %17 = arith.divf %15, %16 : vector<16x1xf32>
    %18 = vector.broadcast %10 : vector<16x1xf32> to vector<16x32xf32>
    %19 = arith.subf %5, %18 : vector<16x32xf32>
    %cst_8 = arith.constant 9.99999974E-6 : f32
    %20 = vector.broadcast %cst_8 : f32 to vector<16x1xf32>
    %21 = arith.addf %17, %20 : vector<16x1xf32>
    %22 = math.rsqrt %21 : vector<16x1xf32>
    %23 = vector.broadcast %22 : vector<16x1xf32> to vector<16x32xf32>
    %24 = arith.mulf %19, %23 : vector<16x32xf32>
    %25 = vector.broadcast %6 : vector<1x32xf32> to vector<16x32xf32>
    %26 = arith.mulf %24, %25 : vector<16x32xf32>
    %cst_9 = arith.constant 0.000000e+00 : f32
    %27 = vector.broadcast %cst_9 : f32 to vector<6x32xf32>
    %c0_10 = arith.constant 0 : index
    %c0_11 = arith.constant 0 : index
    %28 = vector.load %arg4[%c0_10, %c0_11] : memref<22x32xf32, #tpu.memory_space<vmem>>, vector<6x32xf32>
    tpu.vector_store %arg4[%c0_10, %c0_11], %27 {strides = array<i32>} : memref<22x32xf32, #tpu.memory_space<vmem>>, vector<6x32xf32>,
    %c6 = arith.constant 6 : index
    %c0_12 = arith.constant 0 : index
    %29 = vector.load %arg4[%c6, %c0_12] : memref<22x32xf32, #tpu.memory_space<vmem>>, vector<16x32xf32>
    tpu.vector_store %arg4[%c6, %c0_12], %26 {strides = array<i32>} : memref<22x32xf32, #tpu.memory_space<vmem>>, vector<16x32xf32>,
    %c208 = arith.constant 208 : index
    %c0_13 = arith.constant 0 : index
    %30 = vector.load %arg2[%c208, %c0_13] : memref<224x128xf32, #tpu.memory_space<vmem>>, vector<4x32xf32>
    %c218 = arith.constant 218 : index
    %c0_14 = arith.constant 0 : index
    %31 = vector.load %arg2[%c218, %c0_14] : memref<224x128xf32, #tpu.memory_space<vmem>>, vector<1x32xf32>
    %c0_15 = arith.constant 0 : index
    %c0_16 = arith.constant 0 : index
    %32 = vector.load %arg4[%c0_15, %c0_16] : memref<22x32xf32, #tpu.memory_space<vmem>>, vector<16x32xf32>
    %33 = vector.extract_strided_slice %30 {offsets = [0, 0], sizes = [1, 32], strides = [1, 1]} : vector<4x32xf32> to vector<1x32xf32>
    %34 = vector.broadcast %33 : vector<1x32xf32> to vector<16x32xf32>
    %35 = arith.mulf %32, %34 : vector<16x32xf32>
    %36 = vector.broadcast %31 : vector<1x32xf32> to vector<16x32xf32>
    %37 = arith.addf %36, %35 : vector<16x32xf32>
    %c2 = arith.constant 2 : index
    %c0_17 = arith.constant 0 : index
    %38 = vector.load %arg4[%c2, %c0_17] : memref<22x32xf32, #tpu.memory_space<vmem>>, vector<16x32xf32>
    %39 = vector.extract_strided_slice %30 {offsets = [1, 0], sizes = [1, 32], strides = [1, 1]} : vector<4x32xf32> to vector<1x32xf32>
    %40 = vector.broadcast %39 : vector<1x32xf32> to vector<16x32xf32>
    %41 = arith.mulf %38, %40 : vector<16x32xf32>
    %42 = arith.addf %37, %41 : vector<16x32xf32>
    %c4 = arith.constant 4 : index
    %c0_18 = arith.constant 0 : index
    %43 = vector.load %arg4[%c4, %c0_18] : memref<22x32xf32, #tpu.memory_space<vmem>>, vector<16x32xf32>
    %44 = vector.extract_strided_slice %30 {offsets = [2, 0], sizes = [1, 32], strides = [1, 1]} : vector<4x32xf32> to vector<1x32xf32>
    %45 = vector.broadcast %44 : vector<1x32xf32> to vector<16x32xf32>
    %46 = arith.mulf %43, %45 : vector<16x32xf32>
    %47 = arith.addf %42, %46 : vector<16x32xf32>
    %c6_19 = arith.constant 6 : index
    %c0_20 = arith.constant 0 : index
    %48 = vector.load %arg4[%c6_19, %c0_20] : memref<22x32xf32, #tpu.memory_space<vmem>>, vector<16x32xf32>
    %49 = vector.extract_strided_slice %30 {offsets = [3, 0], sizes = [1, 32], strides = [1, 1]} : vector<4x32xf32> to vector<1x32xf32>
    %50 = vector.broadcast %49 : vector<1x32xf32> to vector<16x32xf32>
    %51 = arith.mulf %48, %50 : vector<16x32xf32>
    %52 = arith.addf %47, %51 : vector<16x32xf32>
    %cst_21 = arith.constant 0.000000e+00 : f32
    %53 = vector.broadcast %cst_21 : f32 to vector<16x32xf32>
    %54 = arith.subf %53, %52 : vector<16x32xf32>
    %55 = math.exp %54 : vector<16x32xf32>
    %cst_22 = arith.constant 1.000000e+00 : f32
    %56 = vector.broadcast %cst_22 : f32 to vector<16x32xf32>
    %57 = arith.addf %56, %55 : vector<16x32xf32>
    %cst_23 = arith.constant 1.000000e+00 : f32
    %58 = vector.broadcast %cst_23 : f32 to vector<16x32xf32>
    %59 = arith.divf %58, %57 : vector<16x32xf32>
    %60 = arith.mulf %52, %59 : vector<16x32xf32>
    %c0_24 = arith.constant 0 : index
    %c0_25 = arith.constant 0 : index
    %61 = vector.load %arg2[%c0_24, %c0_25] : memref<224x128xf32, #tpu.memory_space<vmem>>, vector<32x64xf32>
    %cst_26 = arith.constant dense<0.000000e+00> : vector<16x64xf32>
    %62 = tpu.matmul %60, %61, %cst_26 {dimension_numbers = #tpu.dot_dimension_numbers<[1], [0], [0], [1], [0, 0, 1, 1], [], []>} : vector<16x32xf32>, vector<32x64xf32>, vector<16x64xf32> -> vector<16x64xf32>
    %c0_27 = arith.constant 0 : index
    %c0_28 = arith.constant 0 : index
    %63 = vector.load %arg5[%c0_27, %c0_28] : memref<16x128xf32, #tpu.memory_space<vmem>>, vector<16x64xf32>
    tpu.vector_store %arg5[%c0_27, %c0_28], %62 {strides = array<i32>} : memref<16x128xf32, #tpu.memory_space<vmem>>, vector<16x64xf32>,
    %c0_29 = arith.constant 0 : index
    %c64 = arith.constant 64 : index
    %64 = vector.load %arg2[%c0_29, %c64] : memref<224x128xf32, #tpu.memory_space<vmem>>, vector<32x64xf32>
    %cst_30 = arith.constant dense<0.000000e+00> : vector<16x64xf32>
    %65 = tpu.matmul %26, %64, %cst_30 {dimension_numbers = #tpu.dot_dimension_numbers<[1], [0], [0], [1], [0, 0, 1, 1], [], []>} : vector<16x32xf32>, vector<32x64xf32>, vector<16x64xf32> -> vector<16x64xf32>
    %c0_31 = arith.constant 0 : index
    %c64_32 = arith.constant 64 : index
    %66 = vector.load %arg5[%c0_31, %c64_32] : memref<16x128xf32, #tpu.memory_space<vmem>>, vector<16x64xf32>
    tpu.vector_store %arg5[%c0_31, %c64_32], %65 {strides = array<i32>} : memref<16x128xf32, #tpu.memory_space<vmem>>, vector<16x64xf32>,
    %c32 = arith.constant 32 : index
    %c0_33 = arith.constant 0 : index
    %67 = vector.load %arg2[%c32, %c0_33] : memref<224x128xf32, #tpu.memory_space<vmem>>, vector<32x128xf32>
    %c219 = arith.constant 219 : index
    %c0_34 = arith.constant 0 : index
    %68 = vector.load %arg2[%c219, %c0_34] : memref<224x128xf32, #tpu.memory_space<vmem>>, vector<1x128xf32>
    %cst_35 = arith.constant 0.000000e+00 : f32
    %69 = vector.broadcast %cst_35 : f32 to vector<2x32xf32>
    %cst_36 = arith.constant 0.000000e+00 : f32
    %70 = vector.broadcast %cst_36 : f32 to vector<2x32xf32>
    %cst_37 = arith.constant 0.000000e+00 : f32
    %71 = vector.broadcast %cst_37 : f32 to vector<2x32xf32>
    %cst_38 = arith.constant 0.000000e+00 : f32
    %72 = vector.broadcast %cst_38 : f32 to vector<2x32xf32>
    %c0_39 = arith.constant 0 : index
    %c0_40 = arith.constant 0 : index
    %73 = vector.load %arg5[%c0_39, %c0_40] : memref<16x128xf32, #tpu.memory_space<vmem>>, vector<2x128xf32>
    %cst_41 = arith.constant dense<0.000000e+00> : vector<2x128xf32>
    %74 = tpu.matmul %69, %67, %cst_41 {dimension_numbers = #tpu.dot_dimension_numbers<[1], [0], [0], [1], [0, 0, 1, 1], [], []>} : vector<2x32xf32>, vector<32x128xf32>, vector<2x128xf32> -> vector<2x128xf32>
    %75 = arith.addf %73, %74 : vector<2x128xf32>
    %76 = vector.broadcast %68 : vector<1x128xf32> to vector<2x128xf32>
    %77 = arith.addf %75, %76 : vector<2x128xf32>
    %78 = vector.extract_strided_slice %77 {offsets = [0, 0], sizes = [2, 32], strides = [1, 1]} : vector<2x128xf32> to vector<2x32xf32>
    %79 = vector.extract_strided_slice %77 {offsets = [0, 32], sizes = [2, 32], strides = [1, 1]} : vector<2x128xf32> to vector<2x32xf32>
    %80 = vector.extract_strided_slice %77 {offsets = [0, 64], sizes = [2, 32], strides = [1, 1]} : vector<2x128xf32> to vector<2x32xf32>
    %81 = vector.extract_strided_slice %77 {offsets = [0, 96], sizes = [2, 32], strides = [1, 1]} : vector<2x128xf32> to vector<2x32xf32>
    %cst_42 = arith.constant 0.000000e+00 : f32
    %82 = vector.broadcast %cst_42 : f32 to vector<2x32xf32>
    %83 = arith.minimumf %79, %82 : vector<2x32xf32>
    %84 = math.absf %79 : vector<2x32xf32>
    %cst_43 = arith.constant 0.000000e+00 : f32
    %85 = vector.broadcast %cst_43 : f32 to vector<2x32xf32>
    %86 = arith.subf %85, %84 : vector<2x32xf32>
    %87 = math.exp %86 : vector<2x32xf32>
    %cst_44 = arith.constant 1.000000e+00 : f32
    %88 = vector.broadcast %cst_44 : f32 to vector<2x32xf32>
    %89 = arith.addf %88, %87 : vector<2x32xf32>
    %90 = math.log %89 : vector<2x32xf32>
    %91 = arith.subf %83, %90 : vector<2x32xf32>
    %92 = arith.addf %72, %91 : vector<2x32xf32>
    %93 = arith.maximumf %78, %92 : vector<2x32xf32>
    %94 = arith.subf %78, %93 : vector<2x32xf32>
    %95 = math.exp %94 : vector<2x32xf32>
    %96 = arith.subf %92, %93 : vector<2x32xf32>
    %97 = math.exp %96 : vector<2x32xf32>
    %98 = arith.mulf %97, %70 : vector<2x32xf32>
    %99 = math.tanh %80 : vector<2x32xf32>
    %100 = arith.mulf %95, %99 : vector<2x32xf32>
    %101 = arith.addf %98, %100 : vector<2x32xf32>
    %102 = arith.mulf %97, %71 : vector<2x32xf32>
    %103 = arith.addf %102, %95 : vector<2x32xf32>
    %cst_45 = arith.constant 0.000000e+00 : f32
    %104 = vector.broadcast %cst_45 : f32 to vector<2x32xf32>
    %105 = arith.subf %104, %81 : vector<2x32xf32>
    %106 = math.exp %105 : vector<2x32xf32>
    %cst_46 = arith.constant 1.000000e+00 : f32
    %107 = vector.broadcast %cst_46 : f32 to vector<2x32xf32>
    %108 = arith.addf %107, %106 : vector<2x32xf32>
    %cst_47 = arith.constant 1.000000e+00 : f32
    %109 = vector.broadcast %cst_47 : f32 to vector<2x32xf32>
    %110 = arith.divf %109, %108 : vector<2x32xf32>
    %111 = arith.mulf %110, %101 : vector<2x32xf32>
    %112 = arith.divf %111, %103 : vector<2x32xf32>
    %c2_48 = arith.constant 2 : index
    %c0_49 = arith.constant 0 : index
    %113 = vector.load %arg5[%c2_48, %c0_49] : memref<16x128xf32, #tpu.memory_space<vmem>>, vector<2x128xf32>
    %cst_50 = arith.constant dense<0.000000e+00> : vector<2x128xf32>
    %114 = tpu.matmul %112, %67, %cst_50 {dimension_numbers = #tpu.dot_dimension_numbers<[1], [0], [0], [1], [0, 0, 1, 1], [], []>} : vector<2x32xf32>, vector<32x128xf32>, vector<2x128xf32> -> vector<2x128xf32>
    %115 = arith.addf %113, %114 : vector<2x128xf32>
    %116 = vector.broadcast %68 : vector<1x128xf32> to vector<2x128xf32>
    %117 = arith.addf %115, %116 : vector<2x128xf32>
    %118 = vector.extract_strided_slice %117 {offsets = [0, 0], sizes = [2, 32], strides = [1, 1]} : vector<2x128xf32> to vector<2x32xf32>
    %119 = vector.extract_strided_slice %117 {offsets = [0, 32], sizes = [2, 32], strides = [1, 1]} : vector<2x128xf32> to vector<2x32xf32>
    %120 = vector.extract_strided_slice %117 {offsets = [0, 64], sizes = [2, 32], strides = [1, 1]} : vector<2x128xf32> to vector<2x32xf32>
    %121 = vector.extract_strided_slice %117 {offsets = [0, 96], sizes = [2, 32], strides = [1, 1]} : vector<2x128xf32> to vector<2x32xf32>
    %cst_51 = arith.constant 0.000000e+00 : f32
    %122 = vector.broadcast %cst_51 : f32 to vector<2x32xf32>
    %123 = arith.minimumf %119, %122 : vector<2x32xf32>
    %124 = math.absf %119 : vector<2x32xf32>
    %cst_52 = arith.constant 0.000000e+00 : f32
    %125 = vector.broadcast %cst_52 : f32 to vector<2x32xf32>
    %126 = arith.subf %125, %124 : vector<2x32xf32>
    %127 = math.exp %126 : vector<2x32xf32>
    %cst_53 = arith.constant 1.000000e+00 : f32
    %128 = vector.broadcast %cst_53 : f32 to vector<2x32xf32>
    %129 = arith.addf %128, %127 : vector<2x32xf32>
    %130 = math.log %129 : vector<2x32xf32>
    %131 = arith.subf %123, %130 : vector<2x32xf32>
    %132 = arith.addf %93, %131 : vector<2x32xf32>
    %133 = arith.maximumf %118, %132 : vector<2x32xf32>
    %134 = arith.subf %118, %133 : vector<2x32xf32>
    %135 = math.exp %134 : vector<2x32xf32>
    %136 = arith.subf %132, %133 : vector<2x32xf32>
    %137 = math.exp %136 : vector<2x32xf32>
    %138 = arith.mulf %137, %101 : vector<2x32xf32>
    %139 = math.tanh %120 : vector<2x32xf32>
    %140 = arith.mulf %135, %139 : vector<2x32xf32>
    %141 = arith.addf %138, %140 : vector<2x32xf32>
    %142 = arith.mulf %137, %103 : vector<2x32xf32>
    %143 = arith.addf %142, %135 : vector<2x32xf32>
    %cst_54 = arith.constant 0.000000e+00 : f32
    %144 = vector.broadcast %cst_54 : f32 to vector<2x32xf32>
    %145 = arith.subf %144, %121 : vector<2x32xf32>
    %146 = math.exp %145 : vector<2x32xf32>
    %cst_55 = arith.constant 1.000000e+00 : f32
    %147 = vector.broadcast %cst_55 : f32 to vector<2x32xf32>
    %148 = arith.addf %147, %146 : vector<2x32xf32>
    %cst_56 = arith.constant 1.000000e+00 : f32
    %149 = vector.broadcast %cst_56 : f32 to vector<2x32xf32>
    %150 = arith.divf %149, %148 : vector<2x32xf32>
    %151 = arith.mulf %150, %141 : vector<2x32xf32>
    %152 = arith.divf %151, %143 : vector<2x32xf32>
    %c4_57 = arith.constant 4 : index
    %c0_58 = arith.constant 0 : index
    %153 = vector.load %arg5[%c4_57, %c0_58] : memref<16x128xf32, #tpu.memory_space<vmem>>, vector<2x128xf32>
    %cst_59 = arith.constant dense<0.000000e+00> : vector<2x128xf32>
    %154 = tpu.matmul %152, %67, %cst_59 {dimension_numbers = #tpu.dot_dimension_numbers<[1], [0], [0], [1], [0, 0, 1, 1], [], []>} : vector<2x32xf32>, vector<32x128xf32>, vector<2x128xf32> -> vector<2x128xf32>
    %155 = arith.addf %153, %154 : vector<2x128xf32>
    %156 = vector.broadcast %68 : vector<1x128xf32> to vector<2x128xf32>
    %157 = arith.addf %155, %156 : vector<2x128xf32>
    %158 = vector.extract_strided_slice %157 {offsets = [0, 0], sizes = [2, 32], strides = [1, 1]} : vector<2x128xf32> to vector<2x32xf32>
    %159 = vector.extract_strided_slice %157 {offsets = [0, 32], sizes = [2, 32], strides = [1, 1]} : vector<2x128xf32> to vector<2x32xf32>
    %160 = vector.extract_strided_slice %157 {offsets = [0, 64], sizes = [2, 32], strides = [1, 1]} : vector<2x128xf32> to vector<2x32xf32>
    %161 = vector.extract_strided_slice %157 {offsets = [0, 96], sizes = [2, 32], strides = [1, 1]} : vector<2x128xf32> to vector<2x32xf32>
    %cst_60 = arith.constant 0.000000e+00 : f32
    %162 = vector.broadcast %cst_60 : f32 to vector<2x32xf32>
    %163 = arith.minimumf %159, %162 : vector<2x32xf32>
    %164 = math.absf %159 : vector<2x32xf32>
    %cst_61 = arith.constant 0.000000e+00 : f32
    %165 = vector.broadcast %cst_61 : f32 to vector<2x32xf32>
    %166 = arith.subf %165, %164 : vector<2x32xf32>
    %167 = math.exp %166 : vector<2x32xf32>
    %cst_62 = arith.constant 1.000000e+00 : f32
    %168 = vector.broadcast %cst_62 : f32 to vector<2x32xf32>
    %169 = arith.addf %168, %167 : vector<2x32xf32>
    %170 = math.log %169 : vector<2x32xf32>
    %171 = arith.subf %163, %170 : vector<2x32xf32>
    %172 = arith.addf %133, %171 : vector<2x32xf32>
    %173 = arith.maximumf %158, %172 : vector<2x32xf32>
    %174 = arith.subf %158, %173 : vector<2x32xf32>
    %175 = math.exp %174 : vector<2x32xf32>
    %176 = arith.subf %172, %173 : vector<2x32xf32>
    %177 = math.exp %176 : vector<2x32xf32>
    %178 = arith.mulf %177, %141 : vector<2x32xf32>
    %179 = math.tanh %160 : vector<2x32xf32>
    %180 = arith.mulf %175, %179 : vector<2x32xf32>
    %181 = arith.addf %178, %180 : vector<2x32xf32>
    %182 = arith.mulf %177, %143 : vector<2x32xf32>
    %183 = arith.addf %182, %175 : vector<2x32xf32>
    %cst_63 = arith.constant 0.000000e+00 : f32
    %184 = vector.broadcast %cst_63 : f32 to vector<2x32xf32>
    %185 = arith.subf %184, %161 : vector<2x32xf32>
    %186 = math.exp %185 : vector<2x32xf32>
    %cst_64 = arith.constant 1.000000e+00 : f32
    %187 = vector.broadcast %cst_64 : f32 to vector<2x32xf32>
    %188 = arith.addf %187, %186 : vector<2x32xf32>
    %cst_65 = arith.constant 1.000000e+00 : f32
    %189 = vector.broadcast %cst_65 : f32 to vector<2x32xf32>
    %190 = arith.divf %189, %188 : vector<2x32xf32>
    %191 = arith.mulf %190, %181 : vector<2x32xf32>
    %192 = arith.divf %191, %183 : vector<2x32xf32>
    %c6_66 = arith.constant 6 : index
    %c0_67 = arith.constant 0 : index
    %193 = vector.load %arg5[%c6_66, %c0_67] : memref<16x128xf32, #tpu.memory_space<vmem>>, vector<2x128xf32>
    %cst_68 = arith.constant dense<0.000000e+00> : vector<2x128xf32>
    %194 = tpu.matmul %192, %67, %cst_68 {dimension_numbers = #tpu.dot_dimension_numbers<[1], [0], [0], [1], [0, 0, 1, 1], [], []>} : vector<2x32xf32>, vector<32x128xf32>, vector<2x128xf32> -> vector<2x128xf32>
    %195 = arith.addf %193, %194 : vector<2x128xf32>
    %196 = vector.broadcast %68 : vector<1x128xf32> to vector<2x128xf32>
    %197 = arith.addf %195, %196 : vector<2x128xf32>
    %198 = vector.extract_strided_slice %197 {offsets = [0, 0], sizes = [2, 32], strides = [1, 1]} : vector<2x128xf32> to vector<2x32xf32>
    %199 = vector.extract_strided_slice %197 {offsets = [0, 32], sizes = [2, 32], strides = [1, 1]} : vector<2x128xf32> to vector<2x32xf32>
    %200 = vector.extract_strided_slice %197 {offsets = [0, 64], sizes = [2, 32], strides = [1, 1]} : vector<2x128xf32> to vector<2x32xf32>
    %201 = vector.extract_strided_slice %197 {offsets = [0, 96], sizes = [2, 32], strides = [1, 1]} : vector<2x128xf32> to vector<2x32xf32>
    %cst_69 = arith.constant 0.000000e+00 : f32
    %202 = vector.broadcast %cst_69 : f32 to vector<2x32xf32>
    %203 = arith.minimumf %199, %202 : vector<2x32xf32>
    %204 = math.absf %199 : vector<2x32xf32>
    %cst_70 = arith.constant 0.000000e+00 : f32
    %205 = vector.broadcast %cst_70 : f32 to vector<2x32xf32>
    %206 = arith.subf %205, %204 : vector<2x32xf32>
    %207 = math.exp %206 : vector<2x32xf32>
    %cst_71 = arith.constant 1.000000e+00 : f32
    %208 = vector.broadcast %cst_71 : f32 to vector<2x32xf32>
    %209 = arith.addf %208, %207 : vector<2x32xf32>
    %210 = math.log %209 : vector<2x32xf32>
    %211 = arith.subf %203, %210 : vector<2x32xf32>
    %212 = arith.addf %173, %211 : vector<2x32xf32>
    %213 = arith.maximumf %198, %212 : vector<2x32xf32>
    %214 = arith.subf %198, %213 : vector<2x32xf32>
    %215 = math.exp %214 : vector<2x32xf32>
    %216 = arith.subf %212, %213 : vector<2x32xf32>
    %217 = math.exp %216 : vector<2x32xf32>
    %218 = arith.mulf %217, %181 : vector<2x32xf32>
    %219 = math.tanh %200 : vector<2x32xf32>
    %220 = arith.mulf %215, %219 : vector<2x32xf32>
    %221 = arith.addf %218, %220 : vector<2x32xf32>
    %222 = arith.mulf %217, %183 : vector<2x32xf32>
    %223 = arith.addf %222, %215 : vector<2x32xf32>
    %cst_72 = arith.constant 0.000000e+00 : f32
    %224 = vector.broadcast %cst_72 : f32 to vector<2x32xf32>
    %225 = arith.subf %224, %201 : vector<2x32xf32>
    %226 = math.exp %225 : vector<2x32xf32>
    %cst_73 = arith.constant 1.000000e+00 : f32
    %227 = vector.broadcast %cst_73 : f32 to vector<2x32xf32>
    %228 = arith.addf %227, %226 : vector<2x32xf32>
    %cst_74 = arith.constant 1.000000e+00 : f32
    %229 = vector.broadcast %cst_74 : f32 to vector<2x32xf32>
    %230 = arith.divf %229, %228 : vector<2x32xf32>
    %231 = arith.mulf %230, %221 : vector<2x32xf32>
    %232 = arith.divf %231, %223 : vector<2x32xf32>
    %c8 = arith.constant 8 : index
    %c0_75 = arith.constant 0 : index
    %233 = vector.load %arg5[%c8, %c0_75] : memref<16x128xf32, #tpu.memory_space<vmem>>, vector<2x128xf32>
    %cst_76 = arith.constant dense<0.000000e+00> : vector<2x128xf32>
    %234 = tpu.matmul %232, %67, %cst_76 {dimension_numbers = #tpu.dot_dimension_numbers<[1], [0], [0], [1], [0, 0, 1, 1], [], []>} : vector<2x32xf32>, vector<32x128xf32>, vector<2x128xf32> -> vector<2x128xf32>
    %235 = arith.addf %233, %234 : vector<2x128xf32>
    %236 = vector.broadcast %68 : vector<1x128xf32> to vector<2x128xf32>
    %237 = arith.addf %235, %236 : vector<2x128xf32>
    %238 = vector.extract_strided_slice %237 {offsets = [0, 0], sizes = [2, 32], strides = [1, 1]} : vector<2x128xf32> to vector<2x32xf32>
    %239 = vector.extract_strided_slice %237 {offsets = [0, 32], sizes = [2, 32], strides = [1, 1]} : vector<2x128xf32> to vector<2x32xf32>
    %240 = vector.extract_strided_slice %237 {offsets = [0, 64], sizes = [2, 32], strides = [1, 1]} : vector<2x128xf32> to vector<2x32xf32>
    %241 = vector.extract_strided_slice %237 {offsets = [0, 96], sizes = [2, 32], strides = [1, 1]} : vector<2x128xf32> to vector<2x32xf32>
    %cst_77 = arith.constant 0.000000e+00 : f32
    %242 = vector.broadcast %cst_77 : f32 to vector<2x32xf32>
    %243 = arith.minimumf %239, %242 : vector<2x32xf32>
    %244 = math.absf %239 : vector<2x32xf32>
    %cst_78 = arith.constant 0.000000e+00 : f32
    %245 = vector.broadcast %cst_78 : f32 to vector<2x32xf32>
    %246 = arith.subf %245, %244 : vector<2x32xf32>
    %247 = math.exp %246 : vector<2x32xf32>
    %cst_79 = arith.constant 1.000000e+00 : f32
    %248 = vector.broadcast %cst_79 : f32 to vector<2x32xf32>
    %249 = arith.addf %248, %247 : vector<2x32xf32>
    %250 = math.log %249 : vector<2x32xf32>
    %251 = arith.subf %243, %250 : vector<2x32xf32>
    %252 = arith.addf %213, %251 : vector<2x32xf32>
    %253 = arith.maximumf %238, %252 : vector<2x32xf32>
    %254 = arith.subf %238, %253 : vector<2x32xf32>
    %255 = math.exp %254 : vector<2x32xf32>
    %256 = arith.subf %252, %253 : vector<2x32xf32>
    %257 = math.exp %256 : vector<2x32xf32>
    %258 = arith.mulf %257, %221 : vector<2x32xf32>
    %259 = math.tanh %240 : vector<2x32xf32>
    %260 = arith.mulf %255, %259 : vector<2x32xf32>
    %261 = arith.addf %258, %260 : vector<2x32xf32>
    %262 = arith.mulf %257, %223 : vector<2x32xf32>
    %263 = arith.addf %262, %255 : vector<2x32xf32>
    %cst_80 = arith.constant 0.000000e+00 : f32
    %264 = vector.broadcast %cst_80 : f32 to vector<2x32xf32>
    %265 = arith.subf %264, %241 : vector<2x32xf32>
    %266 = math.exp %265 : vector<2x32xf32>
    %cst_81 = arith.constant 1.000000e+00 : f32
    %267 = vector.broadcast %cst_81 : f32 to vector<2x32xf32>
    %268 = arith.addf %267, %266 : vector<2x32xf32>
    %cst_82 = arith.constant 1.000000e+00 : f32
    %269 = vector.broadcast %cst_82 : f32 to vector<2x32xf32>
    %270 = arith.divf %269, %268 : vector<2x32xf32>
    %271 = arith.mulf %270, %261 : vector<2x32xf32>
    %272 = arith.divf %271, %263 : vector<2x32xf32>
    %c10 = arith.constant 10 : index
    %c0_83 = arith.constant 0 : index
    %273 = vector.load %arg5[%c10, %c0_83] : memref<16x128xf32, #tpu.memory_space<vmem>>, vector<2x128xf32>
    %cst_84 = arith.constant dense<0.000000e+00> : vector<2x128xf32>
    %274 = tpu.matmul %272, %67, %cst_84 {dimension_numbers = #tpu.dot_dimension_numbers<[1], [0], [0], [1], [0, 0, 1, 1], [], []>} : vector<2x32xf32>, vector<32x128xf32>, vector<2x128xf32> -> vector<2x128xf32>
    %275 = arith.addf %273, %274 : vector<2x128xf32>
    %276 = vector.broadcast %68 : vector<1x128xf32> to vector<2x128xf32>
    %277 = arith.addf %275, %276 : vector<2x128xf32>
    %278 = vector.extract_strided_slice %277 {offsets = [0, 0], sizes = [2, 32], strides = [1, 1]} : vector<2x128xf32> to vector<2x32xf32>
    %279 = vector.extract_strided_slice %277 {offsets = [0, 32], sizes = [2, 32], strides = [1, 1]} : vector<2x128xf32> to vector<2x32xf32>
    %280 = vector.extract_strided_slice %277 {offsets = [0, 64], sizes = [2, 32], strides = [1, 1]} : vector<2x128xf32> to vector<2x32xf32>
    %281 = vector.extract_strided_slice %277 {offsets = [0, 96], sizes = [2, 32], strides = [1, 1]} : vector<2x128xf32> to vector<2x32xf32>
    %cst_85 = arith.constant 0.000000e+00 : f32
    %282 = vector.broadcast %cst_85 : f32 to vector<2x32xf32>
    %283 = arith.minimumf %279, %282 : vector<2x32xf32>
    %284 = math.absf %279 : vector<2x32xf32>
    %cst_86 = arith.constant 0.000000e+00 : f32
    %285 = vector.broadcast %cst_86 : f32 to vector<2x32xf32>
    %286 = arith.subf %285, %284 : vector<2x32xf32>
    %287 = math.exp %286 : vector<2x32xf32>
    %cst_87 = arith.constant 1.000000e+00 : f32
    %288 = vector.broadcast %cst_87 : f32 to vector<2x32xf32>
    %289 = arith.addf %288, %287 : vector<2x32xf32>
    %290 = math.log %289 : vector<2x32xf32>
    %291 = arith.subf %283, %290 : vector<2x32xf32>
    %292 = arith.addf %253, %291 : vector<2x32xf32>
    %293 = arith.maximumf %278, %292 : vector<2x32xf32>
    %294 = arith.subf %278, %293 : vector<2x32xf32>
    %295 = math.exp %294 : vector<2x32xf32>
    %296 = arith.subf %292, %293 : vector<2x32xf32>
    %297 = math.exp %296 : vector<2x32xf32>
    %298 = arith.mulf %297, %261 : vector<2x32xf32>
    %299 = math.tanh %280 : vector<2x32xf32>
    %300 = arith.mulf %295, %299 : vector<2x32xf32>
    %301 = arith.addf %298, %300 : vector<2x32xf32>
    %302 = arith.mulf %297, %263 : vector<2x32xf32>
    %303 = arith.addf %302, %295 : vector<2x32xf32>
    %cst_88 = arith.constant 0.000000e+00 : f32
    %304 = vector.broadcast %cst_88 : f32 to vector<2x32xf32>
    %305 = arith.subf %304, %281 : vector<2x32xf32>
    %306 = math.exp %305 : vector<2x32xf32>
    %cst_89 = arith.constant 1.000000e+00 : f32
    %307 = vector.broadcast %cst_89 : f32 to vector<2x32xf32>
    %308 = arith.addf %307, %306 : vector<2x32xf32>
    %cst_90 = arith.constant 1.000000e+00 : f32
    %309 = vector.broadcast %cst_90 : f32 to vector<2x32xf32>
    %310 = arith.divf %309, %308 : vector<2x32xf32>
    %311 = arith.mulf %310, %301 : vector<2x32xf32>
    %312 = arith.divf %311, %303 : vector<2x32xf32>
    %c12 = arith.constant 12 : index
    %c0_91 = arith.constant 0 : index
    %313 = vector.load %arg5[%c12, %c0_91] : memref<16x128xf32, #tpu.memory_space<vmem>>, vector<2x128xf32>
    %cst_92 = arith.constant dense<0.000000e+00> : vector<2x128xf32>
    %314 = tpu.matmul %312, %67, %cst_92 {dimension_numbers = #tpu.dot_dimension_numbers<[1], [0], [0], [1], [0, 0, 1, 1], [], []>} : vector<2x32xf32>, vector<32x128xf32>, vector<2x128xf32> -> vector<2x128xf32>
    %315 = arith.addf %313, %314 : vector<2x128xf32>
    %316 = vector.broadcast %68 : vector<1x128xf32> to vector<2x128xf32>
    %317 = arith.addf %315, %316 : vector<2x128xf32>
    %318 = vector.extract_strided_slice %317 {offsets = [0, 0], sizes = [2, 32], strides = [1, 1]} : vector<2x128xf32> to vector<2x32xf32>
    %319 = vector.extract_strided_slice %317 {offsets = [0, 32], sizes = [2, 32], strides = [1, 1]} : vector<2x128xf32> to vector<2x32xf32>
    %320 = vector.extract_strided_slice %317 {offsets = [0, 64], sizes = [2, 32], strides = [1, 1]} : vector<2x128xf32> to vector<2x32xf32>
    %321 = vector.extract_strided_slice %317 {offsets = [0, 96], sizes = [2, 32], strides = [1, 1]} : vector<2x128xf32> to vector<2x32xf32>
    %cst_93 = arith.constant 0.000000e+00 : f32
    %322 = vector.broadcast %cst_93 : f32 to vector<2x32xf32>
    %323 = arith.minimumf %319, %322 : vector<2x32xf32>
    %324 = math.absf %319 : vector<2x32xf32>
    %cst_94 = arith.constant 0.000000e+00 : f32
    %325 = vector.broadcast %cst_94 : f32 to vector<2x32xf32>
    %326 = arith.subf %325, %324 : vector<2x32xf32>
    %327 = math.exp %326 : vector<2x32xf32>
    %cst_95 = arith.constant 1.000000e+00 : f32
    %328 = vector.broadcast %cst_95 : f32 to vector<2x32xf32>
    %329 = arith.addf %328, %327 : vector<2x32xf32>
    %330 = math.log %329 : vector<2x32xf32>
    %331 = arith.subf %323, %330 : vector<2x32xf32>
    %332 = arith.addf %293, %331 : vector<2x32xf32>
    %333 = arith.maximumf %318, %332 : vector<2x32xf32>
    %334 = arith.subf %318, %333 : vector<2x32xf32>
    %335 = math.exp %334 : vector<2x32xf32>
    %336 = arith.subf %332, %333 : vector<2x32xf32>
    %337 = math.exp %336 : vector<2x32xf32>
    %338 = arith.mulf %337, %301 : vector<2x32xf32>
    %339 = math.tanh %320 : vector<2x32xf32>
    %340 = arith.mulf %335, %339 : vector<2x32xf32>
    %341 = arith.addf %338, %340 : vector<2x32xf32>
    %342 = arith.mulf %337, %303 : vector<2x32xf32>
    %343 = arith.addf %342, %335 : vector<2x32xf32>
    %cst_96 = arith.constant 0.000000e+00 : f32
    %344 = vector.broadcast %cst_96 : f32 to vector<2x32xf32>
    %345 = arith.subf %344, %321 : vector<2x32xf32>
    %346 = math.exp %345 : vector<2x32xf32>
    %cst_97 = arith.constant 1.000000e+00 : f32
    %347 = vector.broadcast %cst_97 : f32 to vector<2x32xf32>
    %348 = arith.addf %347, %346 : vector<2x32xf32>
    %cst_98 = arith.constant 1.000000e+00 : f32
    %349 = vector.broadcast %cst_98 : f32 to vector<2x32xf32>
    %350 = arith.divf %349, %348 : vector<2x32xf32>
    %351 = arith.mulf %350, %341 : vector<2x32xf32>
    %352 = arith.divf %351, %343 : vector<2x32xf32>
    %c14 = arith.constant 14 : index
    %c0_99 = arith.constant 0 : index
    %353 = vector.load %arg5[%c14, %c0_99] : memref<16x128xf32, #tpu.memory_space<vmem>>, vector<2x128xf32>
    %cst_100 = arith.constant dense<0.000000e+00> : vector<2x128xf32>
    %354 = tpu.matmul %352, %67, %cst_100 {dimension_numbers = #tpu.dot_dimension_numbers<[1], [0], [0], [1], [0, 0, 1, 1], [], []>} : vector<2x32xf32>, vector<32x128xf32>, vector<2x128xf32> -> vector<2x128xf32>
    %355 = arith.addf %353, %354 : vector<2x128xf32>
    %356 = vector.broadcast %68 : vector<1x128xf32> to vector<2x128xf32>
    %357 = arith.addf %355, %356 : vector<2x128xf32>
    %358 = vector.extract_strided_slice %357 {offsets = [0, 0], sizes = [2, 32], strides = [1, 1]} : vector<2x128xf32> to vector<2x32xf32>
    %359 = vector.extract_strided_slice %357 {offsets = [0, 32], sizes = [2, 32], strides = [1, 1]} : vector<2x128xf32> to vector<2x32xf32>
    %360 = vector.extract_strided_slice %357 {offsets = [0, 64], sizes = [2, 32], strides = [1, 1]} : vector<2x128xf32> to vector<2x32xf32>
    %361 = vector.extract_strided_slice %357 {offsets = [0, 96], sizes = [2, 32], strides = [1, 1]} : vector<2x128xf32> to vector<2x32xf32>
    %cst_101 = arith.constant 0.000000e+00 : f32
    %362 = vector.broadcast %cst_101 : f32 to vector<2x32xf32>
    %363 = arith.minimumf %359, %362 : vector<2x32xf32>
    %364 = math.absf %359 : vector<2x32xf32>
    %cst_102 = arith.constant 0.000000e+00 : f32
    %365 = vector.broadcast %cst_102 : f32 to vector<2x32xf32>
    %366 = arith.subf %365, %364 : vector<2x32xf32>
    %367 = math.exp %366 : vector<2x32xf32>
    %cst_103 = arith.constant 1.000000e+00 : f32
    %368 = vector.broadcast %cst_103 : f32 to vector<2x32xf32>
    %369 = arith.addf %368, %367 : vector<2x32xf32>
    %370 = math.log %369 : vector<2x32xf32>
    %371 = arith.subf %363, %370 : vector<2x32xf32>
    %372 = arith.addf %333, %371 : vector<2x32xf32>
    %373 = arith.maximumf %358, %372 : vector<2x32xf32>
    %374 = arith.subf %358, %373 : vector<2x32xf32>
    %375 = math.exp %374 : vector<2x32xf32>
    %376 = arith.subf %372, %373 : vector<2x32xf32>
    %377 = math.exp %376 : vector<2x32xf32>
    %378 = arith.mulf %377, %341 : vector<2x32xf32>
    %379 = math.tanh %360 : vector<2x32xf32>
    %380 = arith.mulf %375, %379 : vector<2x32xf32>
    %381 = arith.addf %378, %380 : vector<2x32xf32>
    %382 = arith.mulf %377, %343 : vector<2x32xf32>
    %383 = arith.addf %382, %375 : vector<2x32xf32>
    %cst_104 = arith.constant 0.000000e+00 : f32
    %384 = vector.broadcast %cst_104 : f32 to vector<2x32xf32>
    %385 = arith.subf %384, %361 : vector<2x32xf32>
    %386 = math.exp %385 : vector<2x32xf32>
    %cst_105 = arith.constant 1.000000e+00 : f32
    %387 = vector.broadcast %cst_105 : f32 to vector<2x32xf32>
    %388 = arith.addf %387, %386 : vector<2x32xf32>
    %cst_106 = arith.constant 1.000000e+00 : f32
    %389 = vector.broadcast %cst_106 : f32 to vector<2x32xf32>
    %390 = arith.divf %389, %388 : vector<2x32xf32>
    %391 = arith.mulf %390, %381 : vector<2x32xf32>
    %392 = arith.divf %391, %383 : vector<2x32xf32>
    %c220 = arith.constant 220 : index
    %c0_107 = arith.constant 0 : index
    %393 = vector.load %arg2[%c220, %c0_107] : memref<224x128xf32, #tpu.memory_space<vmem>>, vector<1x32xf32>
    %cst_108 = arith.constant dense<0.000000e+00> : vector<2xf32>
    %394 = vector.multi_reduction <add>, %392, %cst_108 [1] : vector<2x32xf32> to vector<2xf32>
    %395 = vector.shape_cast %394 : vector<2xf32> to vector<2x1xf32>
    %cst_109 = arith.constant 3.200000e+01 : f32
    %396 = vector.broadcast %cst_109 : f32 to vector<2x1xf32>
    %397 = arith.divf %395, %396 : vector<2x1xf32>
    %398 = vector.broadcast %397 : vector<2x1xf32> to vector<2x32xf32>
    %399 = arith.subf %392, %398 : vector<2x32xf32>
    %400 = arith.mulf %399, %399 : vector<2x32xf32>
    %cst_110 = arith.constant dense<0.000000e+00> : vector<2xf32>
    %401 = vector.multi_reduction <add>, %400, %cst_110 [1] : vector<2x32xf32> to vector<2xf32>
    %402 = vector.shape_cast %401 : vector<2xf32> to vector<2x1xf32>
    %cst_111 = arith.constant 3.200000e+01 : f32
    %403 = vector.broadcast %cst_111 : f32 to vector<2x1xf32>
    %404 = arith.divf %402, %403 : vector<2x1xf32>
    %405 = vector.broadcast %397 : vector<2x1xf32> to vector<2x32xf32>
    %406 = arith.subf %392, %405 : vector<2x32xf32>
    %cst_112 = arith.constant 9.99999974E-6 : f32
    %407 = vector.broadcast %cst_112 : f32 to vector<2x1xf32>
    %408 = arith.addf %404, %407 : vector<2x1xf32>
    %409 = math.rsqrt %408 : vector<2x1xf32>
    %410 = vector.broadcast %409 : vector<2x1xf32> to vector<2x32xf32>
    %411 = arith.mulf %406, %410 : vector<2x32xf32>
    %412 = vector.broadcast %393 : vector<1x32xf32> to vector<2x32xf32>
    %413 = arith.mulf %411, %412 : vector<2x32xf32>
    %414 = vector.extract_strided_slice %5 {offsets = [14, 0], sizes = [2, 32], strides = [1, 1]} : vector<16x32xf32> to vector<2x32xf32>
    %415 = arith.addf %414, %413 : vector<2x32xf32>
    %c221 = arith.constant 221 : index
    %c0_113 = arith.constant 0 : index
    %416 = vector.load %arg2[%c221, %c0_113] : memref<224x128xf32, #tpu.memory_space<vmem>>, vector<1x32xf32>
    %cst_114 = arith.constant dense<0.000000e+00> : vector<2xf32>
    %417 = vector.multi_reduction <add>, %415, %cst_114 [1] : vector<2x32xf32> to vector<2xf32>
    %418 = vector.shape_cast %417 : vector<2xf32> to vector<2x1xf32>
    %cst_115 = arith.constant 3.200000e+01 : f32
    %419 = vector.broadcast %cst_115 : f32 to vector<2x1xf32>
    %420 = arith.divf %418, %419 : vector<2x1xf32>
    %421 = vector.broadcast %420 : vector<2x1xf32> to vector<2x32xf32>
    %422 = arith.subf %415, %421 : vector<2x32xf32>
    %423 = arith.mulf %422, %422 : vector<2x32xf32>
    %cst_116 = arith.constant dense<0.000000e+00> : vector<2xf32>
    %424 = vector.multi_reduction <add>, %423, %cst_116 [1] : vector<2x32xf32> to vector<2xf32>
    %425 = vector.shape_cast %424 : vector<2xf32> to vector<2x1xf32>
    %cst_117 = arith.constant 3.200000e+01 : f32
    %426 = vector.broadcast %cst_117 : f32 to vector<2x1xf32>
    %427 = arith.divf %425, %426 : vector<2x1xf32>
    %428 = vector.broadcast %420 : vector<2x1xf32> to vector<2x32xf32>
    %429 = arith.subf %415, %428 : vector<2x32xf32>
    %cst_118 = arith.constant 9.99999974E-6 : f32
    %430 = vector.broadcast %cst_118 : f32 to vector<2x1xf32>
    %431 = arith.addf %427, %430 : vector<2x1xf32>
    %432 = math.rsqrt %431 : vector<2x1xf32>
    %433 = vector.broadcast %432 : vector<2x1xf32> to vector<2x32xf32>
    %434 = arith.mulf %429, %433 : vector<2x32xf32>
    %435 = vector.broadcast %416 : vector<1x32xf32> to vector<2x32xf32>
    %436 = arith.mulf %434, %435 : vector<2x32xf32>
    %c64_119 = arith.constant 64 : index
    %c0_120 = arith.constant 0 : index
    %437 = vector.load %arg2[%c64_119, %c0_120] : memref<224x128xf32, #tpu.memory_space<vmem>>, vector<32x128xf32>
    %cst_121 = arith.constant dense<0.000000e+00> : vector<2x128xf32>
    %438 = tpu.matmul %436, %437, %cst_121 {dimension_numbers = #tpu.dot_dimension_numbers<[1], [0], [0], [1], [0, 0, 1, 1], [], []>} : vector<2x32xf32>, vector<32x128xf32>, vector<2x128xf32> -> vector<2x128xf32>
    %439 = vector.extract_strided_slice %438 {offsets = [0, 0], sizes = [2, 64], strides = [1, 1]} : vector<2x128xf32> to vector<2x64xf32>
    %440 = arith.mulf %439, %439 : vector<2x64xf32>
    %441 = arith.mulf %439, %440 : vector<2x64xf32>
    %cst_122 = arith.constant 4.471500e-02 : f32
    %442 = vector.broadcast %cst_122 : f32 to vector<2x64xf32>
    %443 = arith.mulf %442, %441 : vector<2x64xf32>
    %444 = arith.addf %439, %443 : vector<2x64xf32>
    %cst_123 = arith.constant 0.797884583 : f32
    %445 = vector.broadcast %cst_123 : f32 to vector<2x64xf32>
    %446 = arith.mulf %445, %444 : vector<2x64xf32>
    %447 = math.tanh %446 : vector<2x64xf32>
    %cst_124 = arith.constant 1.000000e+00 : f32
    %448 = vector.broadcast %cst_124 : f32 to vector<2x64xf32>
    %449 = arith.addf %448, %447 : vector<2x64xf32>
    %cst_125 = arith.constant 5.000000e-01 : f32
    %450 = vector.broadcast %cst_125 : f32 to vector<2x64xf32>
    %451 = arith.mulf %450, %449 : vector<2x64xf32>
    %452 = arith.mulf %439, %451 : vector<2x64xf32>
    %453 = vector.extract_strided_slice %438 {offsets = [0, 64], sizes = [2, 64], strides = [1, 1]} : vector<2x128xf32> to vector<2x64xf32>
    %454 = arith.mulf %452, %453 : vector<2x64xf32>
    %c96 = arith.constant 96 : index
    %c0_126 = arith.constant 0 : index
    %455 = vector.load %arg2[%c96, %c0_126] : memref<224x128xf32, #tpu.memory_space<vmem>>, vector<64x32xf32>
    %cst_127 = arith.constant dense<0.000000e+00> : vector<2x32xf32>
    %456 = tpu.matmul %454, %455, %cst_127 {dimension_numbers = #tpu.dot_dimension_numbers<[1], [0], [0], [1], [0, 0, 1, 1], [], []>} : vector<2x64xf32>, vector<64x32xf32>, vector<2x32xf32> -> vector<2x32xf32>
    %457 = arith.addf %415, %456 : vector<2x32xf32>
    %c222 = arith.constant 222 : index
    %c0_128 = arith.constant 0 : index
    %458 = vector.load %arg2[%c222, %c0_128] : memref<224x128xf32, #tpu.memory_space<vmem>>, vector<1x32xf32>
    %cst_129 = arith.constant dense<0.000000e+00> : vector<2xf32>
    %459 = vector.multi_reduction <add>, %457, %cst_129 [1] : vector<2x32xf32> to vector<2xf32>
    %460 = vector.shape_cast %459 : vector<2xf32> to vector<2x1xf32>
    %cst_130 = arith.constant 3.200000e+01 : f32
    %461 = vector.broadcast %cst_130 : f32 to vector<2x1xf32>
    %462 = arith.divf %460, %461 : vector<2x1xf32>
    %463 = vector.broadcast %462 : vector<2x1xf32> to vector<2x32xf32>
    %464 = arith.subf %457, %463 : vector<2x32xf32>
    %465 = arith.mulf %464, %464 : vector<2x32xf32>
    %cst_131 = arith.constant dense<0.000000e+00> : vector<2xf32>
    %466 = vector.multi_reduction <add>, %465, %cst_131 [1] : vector<2x32xf32> to vector<2xf32>
    %467 = vector.shape_cast %466 : vector<2xf32> to vector<2x1xf32>
    %cst_132 = arith.constant 3.200000e+01 : f32
    %468 = vector.broadcast %cst_132 : f32 to vector<2x1xf32>
    %469 = arith.divf %467, %468 : vector<2x1xf32>
    %470 = vector.broadcast %462 : vector<2x1xf32> to vector<2x32xf32>
    %471 = arith.subf %457, %470 : vector<2x32xf32>
    %cst_133 = arith.constant 9.99999974E-6 : f32
    %472 = vector.broadcast %cst_133 : f32 to vector<2x1xf32>
    %473 = arith.addf %469, %472 : vector<2x1xf32>
    %474 = math.rsqrt %473 : vector<2x1xf32>
    %475 = vector.broadcast %474 : vector<2x1xf32> to vector<2x32xf32>
    %476 = arith.mulf %471, %475 : vector<2x32xf32>
    %477 = vector.broadcast %458 : vector<1x32xf32> to vector<2x32xf32>
    %478 = arith.mulf %476, %477 : vector<2x32xf32>
    %c176 = arith.constant 176 : index
    %c0_134 = arith.constant 0 : index
    %479 = vector.load %arg2[%c176, %c0_134] : memref<224x128xf32, #tpu.memory_space<vmem>>, vector<32x4xf32>
    %cst_135 = arith.constant dense<0.000000e+00> : vector<2x4xf32>
    %480 = tpu.matmul %478, %479, %cst_135 {dimension_numbers = #tpu.dot_dimension_numbers<[1], [0], [0], [1], [0, 0, 1, 1], [], []>} : vector<2x32xf32>, vector<32x4xf32>, vector<2x4xf32> -> vector<2x4xf32>
    %c223 = arith.constant 223 : index
    %c0_136 = arith.constant 0 : index
    %481 = vector.load %arg2[%c223, %c0_136] : memref<224x128xf32, #tpu.memory_space<vmem>>, vector<1x4xf32>
    %482 = vector.broadcast %481 : vector<1x4xf32> to vector<2x4xf32>
    %483 = arith.addf %480, %482 : vector<2x4xf32>
    %c0_137 = arith.constant 0 : index
    %c0_138 = arith.constant 0 : index
    %484 = vector.load %arg3[%c0_137, %c0_138] : memref<2x4xf32, #tpu.memory_space<vmem>>, vector<2x4xf32>
    tpu.vector_store %arg3[%c0_137, %c0_138], %483 {strides = array<i32>} : memref<2x4xf32, #tpu.memory_space<vmem>>, vector<2x4xf32>,
    return
  }
  func.func @transform_0(%arg0: i32) -> (i32, i32) {
    %c0_i32 = arith.constant 0 : i32
    %c0_i32_0 = arith.constant 0 : i32
    %c0_i32_1 = arith.constant 0 : i32
    return %c0_i32, %c0_i32_0 : i32, i32
  }
  func.func @transform_1(%arg0: i32) -> (i32, i32) {
    %c0_i32 = arith.constant 0 : i32
    %c0_i32_0 = arith.constant 0 : i32
    %c0_i32_1 = arith.constant 0 : i32
    return %c0_i32, %c0_i32_0 : i32, i32
  }
  func.func @transform_2(%arg0: i32) -> (i32, i32) {
    %c0_i32 = arith.constant 0 : i32
    %c0_i32_0 = arith.constant 0 : i32
    %c0_i32_1 = arith.constant 0 : i32
    return %c0_i32, %c0_i32_0 : i32, i32
  }
}

</mosaic_0001>

<llo_original>
// kernel: tpu_custom_call.1
$region0: #{tpu_custom_call.1}
  #allocation0 [shape = 'u32[]', space=smem, size = 0x4, offset = 0x4, fixed_abs, tag = 'smem constant byte address 0x4 - core index']
  #allocation1 [shape = 'u32[72,128]{1,0:T(1,128)}', space=vmem, size = 0x9000, scoped, tag = 'internal scratch']
  #allocation2 [shape = 'f32[22,32]{1,0:T(8,128)}', space=vmem, size = 0x3000, scoped, tag = 'scratch operand']
  #allocation3 [shape = 'f32[16,128]{1,0:T(8,128)}', space=vmem, size = 0x2000, scoped, tag = 'scratch operand']
  %s0 = inlined_call_operand.hbm [shape: f32[16,16], index: 0, kind: input, shape index: {}]
  %s1 = inlined_call_operand.hbm [shape: f32[224,128], index: 1, kind: input, shape index: {}]
  %s2 = inlined_call_operand.hbm [shape: f32[2,4], index: 2, kind: output, shape index: {}]
  %s3 = sld [smem:[#allocation0]]
  $region26: #{tpu_custom_call.1} parent=0
    _
  %s5 = ssub.s32 1, %s3
  %s6 = scalar_select 0, %s5, %s3
  $region1: #{tpu_custom_call.1} parent=0
    #allocation4 [shape = 'u8[8192]{0}', space=vmem, size = 0x2000, scoped, tag = 'input window, operand 0, single buffered']
    #allocation5 [shape = 's32[1]{0}', space=sflag, size = 0x4, scoped, tag = 'scoped memory for tpu_custom_call.1']
    #allocation6 [shape = 's32[1]{0}', space=sflag, size = 0x4, scoped, tag = 'scoped memory for tpu_custom_call.1']
    #allocation7 [shape = 'u8[114688]{0}', space=vmem, size = 0x1c000, scoped, tag = 'input window, operand 1, single buffered']
    #allocation8 [shape = 's32[1]{0}', space=sflag, size = 0x4, scoped, tag = 'scoped memory for tpu_custom_call.1']
    #allocation9 [shape = 'u8[1024]{0}', space=vmem, size = 0x400, scoped, tag = 'output window, operand 0, single buffered']
    %7 = vsyncpa [#allocation5], 0
    %8 = vsyncpa [#allocation8], 0
    %9 = vsyncpa [#allocation6], 0
    // Predicated region
    $region2: #{tpu_custom_call.1} parent=1 // pred_check
      _
    $region3: #{tpu_custom_call.1} parent=1 // pred_check_branch
      %11 = sbr.rel (0) target = $region5
    $region4: #{tpu_custom_call.1} parent=1 // pred_region
      %13 = vsyncadd [#allocation5], 0
      %s14 = sshll.u32 %s0, 4
      %s15 = int_to_ptr.hbm [resolvable:$true] %s14
      %s16 = sshll.u32 [#allocation4], 4
      %s17 = int_to_ptr.vmem [resolvable:$true] %s16
      %22 = dma.hbm_to_vmem [thread:$0]  %s15, 256, %s17, [#allocation5], 128, 128, 8
    $region5: #{tpu_custom_call.1} parent=1 // pred_fallthru
      _
    // Predicated region
    $region6: #{tpu_custom_call.1} parent=1 // pred_check
      _
    $region7: #{tpu_custom_call.1} parent=1 // pred_check_branch
      %24 = sbr.rel (0) target = $region9
    $region8: #{tpu_custom_call.1} parent=1 // pred_region
      %26 = vsyncadd [#allocation8], 0
      %s27 = sshll.u32 %s1, 4
      %s28 = int_to_ptr.hbm [resolvable:$true] %s27
      %s29 = sshll.u32 [#allocation7], 4
      %s30 = int_to_ptr.vmem [resolvable:$true] %s29
      %35 = dma.hbm_to_vmem [thread:$0]  %s28, 3584, %s30, [#allocation8], 128, 128, 8
    $region9: #{tpu_custom_call.1} parent=1 // pred_fallthru
      _
    // Predicated region
    $region10: #{tpu_custom_call.1} parent=1 // pred_check
      _
    $region11: #{tpu_custom_call.1} parent=1 // pred_check_branch
      %37 = sbr.rel (0) target = $region13
    $region12: #{tpu_custom_call.1} parent=1 // pred_region
      %39 = dma.done [#allocation5], 256
    $region13: #{tpu_custom_call.1} parent=1 // pred_fallthru
      _
    // Predicated region
    $region14: #{tpu_custom_call.1} parent=1 // pred_check
      _
    $region15: #{tpu_custom_call.1} parent=1 // pred_check_branch
      %41 = sbr.rel (0) target = $region17
    $region16: #{tpu_custom_call.1} parent=1 // pred_region
      %43 = dma.done [#allocation8], 3584
    $region17: #{tpu_custom_call.1} parent=1 // pred_fallthru
      _
    %v44 = vld [vmem:[#allocation4] sm:$0xff]
    %v45 = vld [vmem:[#allocation4 + $0x8] sm:$0xff]
    %v46 = vld [vmem:[#allocation7 + $0xa0] sm:$0xff]
    %v47 = vld [vmem:[#allocation7 + $0xa8] sm:$0xff]
    %v48 = vld [vmem:[#allocation7 + $0xd8] sm:$0x1]
    %v49 = vperm.slane %v48, 0
    %vm50 = vcmask 130048
    %v52 = vsel %vm50, %v44, 0
    %v55 = vsel %vm50, %v45, 0
    %57 = vmatpush.msra.mxu0 0.0
    %58 = vmatpush.msra.mxu0 0.0
    %59 = vmatpush.msra.mxu0 0.0
    %60 = vmatpush.msra.mxu0 0.0
    %61 = vmatpush.msra.mxu0 0.0
    %62 = vmatpush.msra.mxu0 0.0
    %63 = vmatpush.msra.mxu0 0.0
    %64 = vmatpush.msra.mxu0 0.0
    %65 = vmatpush.msra.mxu0 0.0
    %66 = vmatpush.msra.mxu0 0.0
    %67 = vmatpush.msra.mxu0 0.0
    %68 = vmatpush.msra.mxu0 0.0
    %69 = vmatpush.msra.mxu0 0.0
    %70 = vmatpush.msra.mxu0 0.0
    %71 = vmatpush.msra.mxu0 %v47
    %72 = vmatpush.msra.mxu0 %v46
    %73 = vmatmul.f32.gmra.mxu0 %v52
    %v74 = vpop.f32.mrf.mxu0
    %v75 = vadd.f32 %v49, %v74
    %76 = vmatmul.f32.gmra.mxu0 %v55
    %v77 = vpop.f32.mrf.mxu0
    %v78 = vadd.f32 %v49, %v77
    %79 = vdwg.mxu0
    %v80 = vld [vmem:[#allocation7 + $0xd9] sm:$0x1]
    %vm81 = vcmask 261120
    %v82 = vsel %vm81, %v75, 0.0
    %83 = vadd.xlane.f32.xlu0 %v82
    %v84 = vpop.xlane.xlu0 %83
    %v85 = vsel %vm81, %v78, 0.0
    %86 = vadd.xlane.f32.xlu0 %v85
    %v87 = vpop.xlane.xlu0 %86
    %v88 = vrcp.pop 32.0
    %v89 = vmul.f32 32.0, %v88
    %v90 = vsub.f32 1.0, %v89
    %v91 = vmul.f32 %v88, %v90
    %v92 = vadd.f32 %v88, %v91
    %vm93 = vweird.f32 %v88
    %v94 = vsel %vm93, %v88, %v92
    %v95 = vmul.f32 %v84, %v94
    %v96 = vmul.f32 %v87, %v94
    %v97 = vsub.f32 %v75, %v95
    %v98 = vsub.f32 %v78, %v96
    %v99 = vmul.f32 %v97, %v97
    %v100 = vmul.f32 %v98, %v98
    %v101 = vsel %vm81, %v99, 0.0
    %102 = vadd.xlane.f32.xlu0 %v101
    %v103 = vpop.xlane.xlu0 %102
    %v104 = vsel %vm81, %v100, 0.0
    %105 = vadd.xlane.f32.xlu0 %v104
    %v106 = vpop.xlane.xlu0 %105
    %v107 = vmul.f32 %v103, %v94
    %v108 = vmul.f32 %v106, %v94
    %v109 = vadd.f32 %v107, 1e-05
    %v110 = vadd.f32 %v108, 1e-05
    %v111 = vrsqrt.pop %v109
    %v112 = vmul.f32 %v111, %v109
    %v113 = vmul.f32 %v112, %v111
    %v114 = vmul.f32 0.5, %v113
    %v115 = vsub.f32 1.5, %v114
    %v116 = vmul.f32 %v111, %v115
    %vm117 = vweird.f32 %v109
    %vm118 = vweird.f32 %v111
    %vm119 = vmor %vm117, %vm118
    %v120 = vsel %vm119, %v111, %v116
    %v121 = vrsqrt.pop %v110
    %v122 = vmul.f32 %v121, %v110
    %v123 = vmul.f32 %v122, %v121
    %v124 = vmul.f32 0.5, %v123
    %v125 = vsub.f32 1.5, %v124
    %v126 = vmul.f32 %v121, %v125
    %vm127 = vweird.f32 %v110
    %vm128 = vweird.f32 %v121
    %vm129 = vmor %vm127, %vm128
    %v130 = vsel %vm129, %v121, %v126
    %v131 = vmul.f32 %v97, %v120
    %v132 = vmul.f32 %v98, %v130
    %v133 = vperm.slane %v80, 0
    %v134 = vmul.f32 %v131, %v133
    %v135 = vmul.f32 %v132, %v133
    %vm136 = vcmask 259072
    %137 = vst.msk [vmem:[#allocation2] sm:$0x3f] %vm136, 0.0
    %138 = vst.msk [vmem:[#allocation2 + $0x6] sm:$0xff] %vm81, %v134
    %139 = vst.msk [vmem:[#allocation2 + $0xe] sm:$0xff] %vm81, %v135
    %v140 = vld [vmem:[#allocation7 + $0xd0] sm:$0xf]
    %v141 = vld [vmem:[#allocation7 + $0xda] sm:$0x1]
    %v142 = vld [vmem:[#allocation2] sm:$0xff]
    %v143 = vld [vmem:[#allocation2 + $0x8] sm:$0xff]
    %v144 = vperm.slane %v140, 0
    %v145 = vmul.f32 %v142, %v144
    %v146 = vmul.f32 %v143, %v144
    %v147 = vperm.slane %v141, 0
    %v148 = vadd.f32 %v147, %v145
    %v149 = vadd.f32 %v147, %v146
    %v150 = vld [vmem:[#allocation2 + $0x2] sm:$0xff]
    %v151 = vld [vmem:[#allocation2 + $0xa] sm:$0xff]
    %v152 = vperm.slane %v140, 1
    %v153 = vmul.f32 %v150, %v152
    %v154 = vmul.f32 %v151, %v152
    %v155 = vadd.f32 %v148, %v153
    %v156 = vadd.f32 %v149, %v154
    %v157 = vld [vmem:[#allocation2 + $0x4] sm:$0xff]
    %v158 = vld [vmem:[#allocation2 + $0xc] sm:$0xff]
    %v159 = vperm.slane %v140, 2
    %v160 = vmul.f32 %v157, %v159
    %v161 = vmul.f32 %v158, %v159
    %v162 = vadd.f32 %v155, %v160
    %v163 = vadd.f32 %v156, %v161
    %v164 = vld [vmem:[#allocation2 + $0x6] sm:$0xff]
    %v165 = vld [vmem:[#allocation2 + $0xe] sm:$0xff]
    %v166 = vperm.slane %v140, 3
    %v167 = vmul.f32 %v164, %v166
    %v168 = vmul.f32 %v165, %v166
    %v169 = vadd.f32 %v162, %v167
    %v170 = vadd.f32 %v163, %v168
    %v171 = vsub.f32 0.0, %v169
    %v172 = vsub.f32 0.0, %v170
    %v173 = vmul.f32 %v171, 1.442695
    %v174 = vpow.pop %v173
    %v175 = vmul.f32 %v172, 1.442695
    %v176 = vpow.pop %v175
    %v177 = vadd.f32 %v174, 1.0
    %v178 = vadd.f32 %v176, 1.0
    %v179 = vrcp.pop %v177
    %v180 = vmul.f32 %v177, %v179
    %v181 = vsub.f32 1.0, %v180
    %v182 = vmul.f32 %v179, %v181
    %v183 = vadd.f32 %v179, %v182
    %vm184 = vweird.f32 %v177
    %vm185 = vweird.f32 %v179
    %vm186 = vmor %vm184, %vm185
    %v187 = vsel %vm186, %v179, %v183
    %v188 = vand.u32 2147483647, %v177
    %vm189 = vcmp.eq.f32.partialorder %v188, 8.507059e+37
    %v190 = vand.u32 %v177, 2147483648
    %v191 = vor.u32 1.1754944e-38, %v190
    %v192 = vsel %vm189, %v191, %v187
    %v193 = vmul.f32 1.0, %v192
    %v194 = vrcp.pop %v178
    %v195 = vmul.f32 %v178, %v194
    %v196 = vsub.f32 1.0, %v195
    %v197 = vmul.f32 %v194, %v196
    %v198 = vadd.f32 %v194, %v197
    %vm199 = vweird.f32 %v178
    %vm200 = vweird.f32 %v194
    %vm201 = vmor %vm199, %vm200
    %v202 = vsel %vm201, %v194, %v198
    %v203 = vand.u32 2147483647, %v178
    %vm204 = vcmp.eq.f32.partialorder %v203, 8.507059e+37
    %v205 = vand.u32 %v178, 2147483648
    %v206 = vor.u32 1.1754944e-38, %v205
    %v207 = vsel %vm204, %v206, %v202
    %v208 = vmul.f32 1.0, %v207
    %v209 = vmul.f32 %v169, %v193
    %v210 = vmul.f32 %v170, %v208
    %v211 = vld [vmem:[#allocation7] sm:$0xff]
    %v212 = vld [vmem:[#allocation7 + $0x8] sm:$0xff]
    %v213 = vld [vmem:[#allocation7 + $0x10] sm:$0xff]
    %v214 = vld [vmem:[#allocation7 + $0x18] sm:$0xff]
    %v216 = vsel %vm81, %v209, 0
    %v219 = vsel %vm81, %v210, 0
    %221 = vmatpush.msra.mxu0 0.0
    %222 = vmatpush.msra.mxu0 0.0
    %223 = vmatpush.msra.mxu0 0.0
    %224 = vmatpush.msra.mxu0 0.0
    %225 = vmatpush.msra.mxu0 0.0
    %226 = vmatpush.msra.mxu0 0.0
    %227 = vmatpush.msra.mxu0 0.0
    %228 = vmatpush.msra.mxu0 0.0
    %229 = vmatpush.msra.mxu0 0.0
    %230 = vmatpush.msra.mxu0 0.0
    %231 = vmatpush.msra.mxu0 0.0
    %232 = vmatpush.msra.mxu0 0.0
    %233 = vmatpush.msra.mxu0 %v214
    %234 = vmatpush.msra.mxu0 %v213
    %235 = vmatpush.msra.mxu0 %v212
    %236 = vmatpush.msra.mxu0 %v211
    %237 = vmatmul.f32.gmra.mxu0 %v216
    %v238 = vpop.f32.mrf.mxu0
    %v239 = vadd.f32 0.0, %v238
    %240 = vmatmul.f32.gmra.mxu0 %v219
    %v241 = vpop.f32.mrf.mxu0
    %v242 = vadd.f32 0.0, %v241
    %243 = vdwg.mxu0
    %vm244 = vcmask 523264
    %245 = vst.msk [vmem:[#allocation3] sm:$0xff] %vm244, %v239
    %246 = vst.msk [vmem:[#allocation3 + $0x8] sm:$0xff] %vm244, %v242
    %v247 = vld [vmem:[#allocation7] sm:$0xff]
    %v248 = vld [vmem:[#allocation7 + $0x8] sm:$0xff]
    %v249 = vld [vmem:[#allocation7 + $0x10] sm:$0xff]
    %v250 = vld [vmem:[#allocation7 + $0x18] sm:$0xff]
    %255 = vrot.lane.b32.xlu0 %v247, 64
    %v256 = vpop.permute.xlu0 %255
    %257 = vrot.lane.b32.xlu0 %v248, 64
    %v258 = vpop.permute.xlu0 %257
    %259 = vrot.lane.b32.xlu0 %v249, 64
    %v260 = vpop.permute.xlu0 %259
    %261 = vrot.lane.b32.xlu0 %v250, 64
    %v262 = vpop.permute.xlu0 %261
    %v268 = vsel %vm81, %v134, 0
    %v271 = vsel %vm81, %v135, 0
    %273 = vmatpush.msra.mxu0 0.0
    %274 = vmatpush.msra.mxu0 0.0
    %275 = vmatpush.msra.mxu0 0.0
    %276 = vmatpush.msra.mxu0 0.0
    %277 = vmatpush.msra.mxu0 0.0
    %278 = vmatpush.msra.mxu0 0.0
    %279 = vmatpush.msra.mxu0 0.0
    %280 = vmatpush.msra.mxu0 0.0
    %281 = vmatpush.msra.mxu0 0.0
    %282 = vmatpush.msra.mxu0 0.0
    %283 = vmatpush.msra.mxu0 0.0
    %284 = vmatpush.msra.mxu0 0.0
    %285 = vmatpush.msra.mxu0 %v262
    %286 = vmatpush.msra.mxu0 %v260
    %287 = vmatpush.msra.mxu0 %v258
    %288 = vmatpush.msra.mxu0 %v256
    %289 = vmatmul.f32.gmra.mxu0 %v268
    %v290 = vpop.f32.mrf.mxu0
    %v291 = vadd.f32 0.0, %v290
    %292 = vmatmul.f32.gmra.mxu0 %v271
    %v293 = vpop.f32.mrf.mxu0
    %v294 = vadd.f32 0.0, %v293
    %295 = vdwg.mxu0
    %298 = vrot.lane.b32.xlu0 %v291, 64
    %v299 = vpop.permute.xlu0 %298
    %300 = vrot.lane.b32.xlu0 %v294, 64
    %v301 = vpop.permute.xlu0 %300
    %vm304 = vcmask 1048064
    %305 = vst.msk [vmem:[#allocation3] sm:$0xff] %vm304, %v299
    %306 = vst.msk [vmem:[#allocation3 + $0x8] sm:$0xff] %vm304, %v301
    %v307 = vld [vmem:[#allocation7 + $0x20] sm:$0xff]
    %v308 = vld [vmem:[#allocation7 + $0x28] sm:$0xff]
    %v309 = vld [vmem:[#allocation7 + $0x30] sm:$0xff]
    %v310 = vld [vmem:[#allocation7 + $0x38] sm:$0xff]
    %v311 = vld [vmem:[#allocation7 + $0xdb] sm:$0x1]
    %v312 = vld [vmem:[#allocation3] sm:$0x3]
    %v314 = vsel %vm81, 0.0, 0
    %316 = vmatpush.msra.mxu0 0.0
    %317 = vmatpush.msra.mxu0 0.0
    %318 = vmatpush.msra.mxu0 0.0
    %319 = vmatpush.msra.mxu0 0.0
    %320 = vmatpush.msra.mxu0 0.0
    %321 = vmatpush.msra.mxu0 0.0
    %322 = vmatpush.msra.mxu0 0.0
    %323 = vmatpush.msra.mxu0 0.0
    %324 = vmatpush.msra.mxu0 0.0
    %325 = vmatpush.msra.mxu0 0.0
    %326 = vmatpush.msra.mxu0 0.0
    %327 = vmatpush.msra.mxu0 0.0
    %328 = vmatpush.msra.mxu0 %v310
    %329 = vmatpush.msra.mxu0 %v309
    %330 = vmatpush.msra.mxu0 %v308
    %331 = vmatpush.msra.mxu0 %v307
    %332 = vmatmul.f32.gmra.mxu0 %v314
    %v333 = vpop.f32.mrf.mxu0
    %v334 = vadd.f32 0.0, %v333
    %335 = vdwg.mxu0
    %v336 = vadd.f32 %v312, %v334
    %v337 = vperm.slane %v311, 0
    %v338 = vadd.f32 %v336, %v337
    %v339 = vmin.f32 %v338, 0.0
    %v340 = vand.u32 2147483647, %v338
    %v341 = vsub.f32 0.0, %v340
    %v342 = vmul.f32 %v341, 1.442695
    %v343 = vpow.pop %v342
    %v344 = vadd.f32 %v343, 1.0
    %v345 = vlog2.pop %v344
    %v346 = vmul.f32 %v345, 0.6931472
    %v347 = vsub.f32 %v339, %v346
    %v348 = vadd.f32 %v347, 0.0
    %350 = vrot.lane.b32.xlu0 %v348, 96
    %v351 = vpop.permute.xlu0 %350
    %v353 = vmax.f32 %v338, %v351
    %v354 = vsub.f32 %v338, %v353
    %v355 = vmul.f32 %v354, 1.442695
    %v356 = vpow.pop %v355
    %358 = vrot.lane.b32.xlu0 %v353, 32
    %v359 = vpop.permute.xlu0 %358
    %v361 = vsub.f32 %v348, %v359
    %v362 = vmul.f32 %v361, 1.442695
    %v363 = vpow.pop %v362
    %v364 = vmul.f32 %v363, 0.0
    %v365 = vtanh.pop %v338
    %367 = vrot.lane.b32.xlu0 %v365, 64
    %v368 = vpop.permute.xlu0 %367
    %v370 = vmul.f32 %v356, %v368
    %372 = vrot.lane.b32.xlu0 %v370, 32
    %v373 = vpop.permute.xlu0 %372
    %v375 = vadd.f32 %v364, %v373
    %377 = vrot.lane.b32.xlu0 %v356, 32
    %v378 = vpop.permute.xlu0 %377
    %v380 = vadd.f32 %v364, %v378
    %v381 = vsub.f32 0.0, %v338
    %v382 = vmul.f32 %v381, 1.442695
    %v383 = vpow.pop %v382
    %v384 = vadd.f32 %v383, 1.0
    %v385 = vrcp.pop %v384
    %v386 = vmul.f32 %v384, %v385
    %v387 = vsub.f32 1.0, %v386
    %v388 = vmul.f32 %v385, %v387
    %v389 = vadd.f32 %v385, %v388
    %vm390 = vweird.f32 %v384
    %vm391 = vweird.f32 %v385
    %vm392 = vmor %vm390, %vm391
    %v393 = vsel %vm392, %v385, %v389
    %v394 = vand.u32 2147483647, %v384
    %vm395 = vcmp.eq.f32.partialorder %v394, 8.507059e+37
    %v396 = vand.u32 %v384, 2147483648
    %v397 = vor.u32 1.1754944e-38, %v396
    %v398 = vsel %vm395, %v397, %v393
    %v399 = vmul.f32 1.0, %v398
    %401 = vrot.lane.b32.xlu0 %v375, 64
    %v402 = vpop.permute.xlu0 %401
    %v404 = vmul.f32 %v399, %v402
    %406 = vrot.lane.b32.xlu0 %v380, 64
    %v407 = vpop.permute.xlu0 %406
    %v409 = vrcp.pop %v407
    %v410 = vmul.f32 %v407, %v409
    %v411 = vsub.f32 1.0, %v410
    %v412 = vmul.f32 %v409, %v411
    %v413 = vadd.f32 %v409, %v412
    %vm414 = vweird.f32 %v407
    %vm415 = vweird.f32 %v409
    %vm416 = vmor %vm414, %vm415
    %v417 = vsel %vm416, %v409, %v413
    %v418 = vand.u32 2147483647, %v407
    %vm419 = vcmp.eq.f32.partialorder %v418, 8.507059e+37
    %v420 = vand.u32 %v407, 2147483648
    %v421 = vor.u32 1.1754944e-38, %v420
    %v422 = vsel %vm419, %v421, %v417
    %v423 = vmul.f32 %v404, %v422
    %v424 = vld [vmem:[#allocation3 + $0x2] sm:$0x3]
    %426 = vrot.lane.b32.xlu0 %v423, 32
    %v427 = vpop.permute.xlu0 %426
    %v428 = vsel %vm81, %v427, 0
    %430 = vmatpush.msra.mxu0 0.0
    %431 = vmatpush.msra.mxu0 0.0
    %432 = vmatpush.msra.mxu0 0.0
    %433 = vmatpush.msra.mxu0 0.0
    %434 = vmatpush.msra.mxu0 0.0
    %435 = vmatpush.msra.mxu0 0.0
    %436 = vmatpush.msra.mxu0 0.0
    %437 = vmatpush.msra.mxu0 0.0
    %438 = vmatpush.msra.mxu0 0.0
    %439 = vmatpush.msra.mxu0 0.0
    %440 = vmatpush.msra.mxu0 0.0
    %441 = vmatpush.msra.mxu0 0.0
    %442 = vmatpush.msra.mxu0 %v310
    %443 = vmatpush.msra.mxu0 %v309
    %444 = vmatpush.msra.mxu0 %v308
    %445 = vmatpush.msra.mxu0 %v307
    %446 = vmatmul.f32.gmra.mxu0 %v428
    %v447 = vpop.f32.mrf.mxu0
    %v448 = vadd.f32 0.0, %v447
    %449 = vdwg.mxu0
    %v450 = vadd.f32 %v424, %v448
    %v451 = vadd.f32 %v450, %v337
    %v452 = vmin.f32 %v451, 0.0
    %v453 = vand.u32 2147483647, %v451
    %v454 = vsub.f32 0.0, %v453
    %v455 = vmul.f32 %v454, 1.442695
    %v456 = vpow.pop %v455
    %v457 = vadd.f32 %v456, 1.0
    %v458 = vlog2.pop %v457
    %v459 = vmul.f32 %v458, 0.6931472
    %v460 = vsub.f32 %v452, %v459
    %462 = vrot.lane.b32.xlu0 %v460, 96
    %v463 = vpop.permute.xlu0 %462
    %v465 = vadd.f32 %v353, %v463
    %v466 = vmax.f32 %v451, %v465
    %v467 = vsub.f32 %v451, %v466
    %v468 = vmul.f32 %v467, 1.442695
    %v469 = vpow.pop %v468
    %v470 = vsub.f32 %v465, %v466
    %v471 = vmul.f32 %v470, 1.442695
    %v472 = vpow.pop %v471
    %473 = vrot.lane.b32.xlu0 %v375, 96
    %v474 = vpop.permute.xlu0 %473
    %v476 = vmul.f32 %v472, %v474
    %v477 = vtanh.pop %v451
    %479 = vrot.lane.b32.xlu0 %v477, 64
    %v480 = vpop.permute.xlu0 %479
    %v482 = vmul.f32 %v469, %v480
    %v483 = vadd.f32 %v476, %v482
    %484 = vrot.lane.b32.xlu0 %v380, 96
    %v485 = vpop.permute.xlu0 %484
    %v487 = vmul.f32 %v472, %v485
    %v488 = vadd.f32 %v487, %v469
    %v489 = vsub.f32 0.0, %v451
    %v490 = vmul.f32 %v489, 1.442695
    %v491 = vpow.pop %v490
    %v492 = vadd.f32 %v491, 1.0
    %v493 = vrcp.pop %v492
    %v494 = vmul.f32 %v492, %v493
    %v495 = vsub.f32 1.0, %v494
    %v496 = vmul.f32 %v493, %v495
    %v497 = vadd.f32 %v493, %v496
    %vm498 = vweird.f32 %v492
    %vm499 = vweird.f32 %v493
    %vm500 = vmor %vm498, %vm499
    %v501 = vsel %vm500, %v493, %v497
    %v502 = vand.u32 2147483647, %v492
    %vm503 = vcmp.eq.f32.partialorder %v502, 8.507059e+37
    %v504 = vand.u32 %v492, 2147483648
    %v505 = vor.u32 1.1754944e-38, %v504
    %v506 = vsel %vm503, %v505, %v501
    %v507 = vmul.f32 1.0, %v506
    %509 = vrot.lane.b32.xlu0 %v483, 96
    %v510 = vpop.permute.xlu0 %509
    %v512 = vmul.f32 %v507, %v510
    %514 = vrot.lane.b32.xlu0 %v488, 96
    %v515 = vpop.permute.xlu0 %514
    %v517 = vrcp.pop %v515
    %v518 = vmul.f32 %v515, %v517
    %v519 = vsub.f32 1.0, %v518
    %v520 = vmul.f32 %v517, %v519
    %v521 = vadd.f32 %v517, %v520
    %vm522 = vweird.f32 %v515
    %vm523 = vweird.f32 %v517
    %vm524 = vmor %vm522, %vm523
    %v525 = vsel %vm524, %v517, %v521
    %v526 = vand.u32 2147483647, %v515
    %vm527 = vcmp.eq.f32.partialorder %v526, 8.507059e+37
    %v528 = vand.u32 %v515, 2147483648
    %v529 = vor.u32 1.1754944e-38, %v528
    %v530 = vsel %vm527, %v529, %v525
    %v531 = vmul.f32 %v512, %v530
    %v532 = vld [vmem:[#allocation3 + $0x4] sm:$0x3]
    %534 = vrot.lane.b32.xlu0 %v531, 32
    %v535 = vpop.permute.xlu0 %534
    %v536 = vsel %vm81, %v535, 0
    %538 = vmatpush.msra.mxu0 0.0
    %539 = vmatpush.msra.mxu0 0.0
    %540 = vmatpush.msra.mxu0 0.0
    %541 = vmatpush.msra.mxu0 0.0
    %542 = vmatpush.msra.mxu0 0.0
    %543 = vmatpush.msra.mxu0 0.0
    %544 = vmatpush.msra.mxu0 0.0
    %545 = vmatpush.msra.mxu0 0.0
    %546 = vmatpush.msra.mxu0 0.0
    %547 = vmatpush.msra.mxu0 0.0
    %548 = vmatpush.msra.mxu0 0.0
    %549 = vmatpush.msra.mxu0 0.0
    %550 = vmatpush.msra.mxu0 %v310
    %551 = vmatpush.msra.mxu0 %v309
    %552 = vmatpush.msra.mxu0 %v308
    %553 = vmatpush.msra.mxu0 %v307
    %554 = vmatmul.f32.gmra.mxu0 %v536
    %v555 = vpop.f32.mrf.mxu0
    %v556 = vadd.f32 0.0, %v555
    %557 = vdwg.mxu0
    %v558 = vadd.f32 %v532, %v556
    %v559 = vadd.f32 %v558, %v337
    %v560 = vmin.f32 %v559, 0.0
    %v561 = vand.u32 2147483647, %v559
    %v562 = vsub.f32 0.0, %v561
    %v563 = vmul.f32 %v562, 1.442695
    %v564 = vpow.pop %v563
    %v565 = vadd.f32 %v564, 1.0
    %v566 = vlog2.pop %v565
    %v567 = vmul.f32 %v566, 0.6931472
    %v568 = vsub.f32 %v560, %v567
    %570 = vrot.lane.b32.xlu0 %v568, 96
    %v571 = vpop.permute.xlu0 %570
    %v573 = vadd.f32 %v466, %v571
    %v574 = vmax.f32 %v559, %v573
    %v575 = vsub.f32 %v559, %v574
    %v576 = vmul.f32 %v575, 1.442695
    %v577 = vpow.pop %v576
    %v578 = vsub.f32 %v573, %v574
    %v579 = vmul.f32 %v578, 1.442695
    %v580 = vpow.pop %v579
    %v581 = vmul.f32 %v580, %v483
    %v582 = vtanh.pop %v559
    %584 = vrot.lane.b32.xlu0 %v582, 64
    %v585 = vpop.permute.xlu0 %584
    %v587 = vmul.f32 %v577, %v585
    %v588 = vadd.f32 %v581, %v587
    %v589 = vmul.f32 %v580, %v488
    %v590 = vadd.f32 %v589, %v577
    %v591 = vsub.f32 0.0, %v559
    %v592 = vmul.f32 %v591, 1.442695
    %v593 = vpow.pop %v592
    %v594 = vadd.f32 %v593, 1.0
    %v595 = vrcp.pop %v594
    %v596 = vmul.f32 %v594, %v595
    %v597 = vsub.f32 1.0, %v596
    %v598 = vmul.f32 %v595, %v597
    %v599 = vadd.f32 %v595, %v598
    %vm600 = vweird.f32 %v594
    %vm601 = vweird.f32 %v595
    %vm602 = vmor %vm600, %vm601
    %v603 = vsel %vm602, %v595, %v599
    %v604 = vand.u32 2147483647, %v594
    %vm605 = vcmp.eq.f32.partialorder %v604, 8.507059e+37
    %v606 = vand.u32 %v594, 2147483648
    %v607 = vor.u32 1.1754944e-38, %v606
    %v608 = vsel %vm605, %v607, %v603
    %v609 = vmul.f32 1.0, %v608
    %611 = vrot.lane.b32.xlu0 %v588, 96
    %v612 = vpop.permute.xlu0 %611
    %v614 = vmul.f32 %v609, %v612
    %616 = vrot.lane.b32.xlu0 %v590, 96
    %v617 = vpop.permute.xlu0 %616
    %v619 = vrcp.pop %v617
    %v620 = vmul.f32 %v617, %v619
    %v621 = vsub.f32 1.0, %v620
    %v622 = vmul.f32 %v619, %v621
    %v623 = vadd.f32 %v619, %v622
    %vm624 = vweird.f32 %v617
    %vm625 = vweird.f32 %v619
    %vm626 = vmor %vm624, %vm625
    %v627 = vsel %vm626, %v619, %v623
    %v628 = vand.u32 2147483647, %v617
    %vm629 = vcmp.eq.f32.partialorder %v628, 8.507059e+37
    %v630 = vand.u32 %v617, 2147483648
    %v631 = vor.u32 1.1754944e-38, %v630
    %v632 = vsel %vm629, %v631, %v627
    %v633 = vmul.f32 %v614, %v632
    %v634 = vld [vmem:[#allocation3 + $0x6] sm:$0x3]
    %636 = vrot.lane.b32.xlu0 %v633, 32
    %v637 = vpop.permute.xlu0 %636
    %v638 = vsel %vm81, %v637, 0
    %640 = vmatpush.msra.mxu0 0.0
    %641 = vmatpush.msra.mxu0 0.0
    %642 = vmatpush.msra.mxu0 0.0
    %643 = vmatpush.msra.mxu0 0.0
    %644 = vmatpush.msra.mxu0 0.0
    %645 = vmatpush.msra.mxu0 0.0
    %646 = vmatpush.msra.mxu0 0.0
    %647 = vmatpush.msra.mxu0 0.0
    %648 = vmatpush.msra.mxu0 0.0
    %649 = vmatpush.msra.mxu0 0.0
    %650 = vmatpush.msra.mxu0 0.0
    %651 = vmatpush.msra.mxu0 0.0
    %652 = vmatpush.msra.mxu0 %v310
    %653 = vmatpush.msra.mxu0 %v309
    %654 = vmatpush.msra.mxu0 %v308
    %655 = vmatpush.msra.mxu0 %v307
    %656 = vmatmul.f32.gmra.mxu0 %v638
    %v657 = vpop.f32.mrf.mxu0
    %v658 = vadd.f32 0.0, %v657
    %659 = vdwg.mxu0
    %v660 = vadd.f32 %v634, %v658
    %v661 = vadd.f32 %v660, %v337
    %v662 = vmin.f32 %v661, 0.0
    %v663 = vand.u32 2147483647, %v661
    %v664 = vsub.f32 0.0, %v663
    %v665 = vmul.f32 %v664, 1.442695
    %v666 = vpow.pop %v665
    %v667 = vadd.f32 %v666, 1.0
    %v668 = vlog2.pop %v667
    %v669 = vmul.f32 %v668, 0.6931472
    %v670 = vsub.f32 %v662, %v669
    %672 = vrot.lane.b32.xlu0 %v670, 96
    %v673 = vpop.permute.xlu0 %672
    %v675 = vadd.f32 %v574, %v673
    %v676 = vmax.f32 %v661, %v675
    %v677 = vsub.f32 %v661, %v676
    %v678 = vmul.f32 %v677, 1.442695
    %v679 = vpow.pop %v678
    %v680 = vsub.f32 %v675, %v676
    %v681 = vmul.f32 %v680, 1.442695
    %v682 = vpow.pop %v681
    %v683 = vmul.f32 %v682, %v588
    %v684 = vtanh.pop %v661
    %686 = vrot.lane.b32.xlu0 %v684, 64
    %v687 = vpop.permute.xlu0 %686
    %v689 = vmul.f32 %v679, %v687
    %v690 = vadd.f32 %v683, %v689
    %v691 = vmul.f32 %v682, %v590
    %v692 = vadd.f32 %v691, %v679
    %v693 = vsub.f32 0.0, %v661
    %v694 = vmul.f32 %v693, 1.442695
    %v695 = vpow.pop %v694
    %v696 = vadd.f32 %v695, 1.0
    %v697 = vrcp.pop %v696
    %v698 = vmul.f32 %v696, %v697
    %v699 = vsub.f32 1.0, %v698
    %v700 = vmul.f32 %v697, %v699
    %v701 = vadd.f32 %v697, %v700
    %vm702 = vweird.f32 %v696
    %vm703 = vweird.f32 %v697
    %vm704 = vmor %vm702, %vm703
    %v705 = vsel %vm704, %v697, %v701
    %v706 = vand.u32 2147483647, %v696
    %vm707 = vcmp.eq.f32.partialorder %v706, 8.507059e+37
    %v708 = vand.u32 %v696, 2147483648
    %v709 = vor.u32 1.1754944e-38, %v708
    %v710 = vsel %vm707, %v709, %v705
    %v711 = vmul.f32 1.0, %v710
    %713 = vrot.lane.b32.xlu0 %v690, 96
    %v714 = vpop.permute.xlu0 %713
    %v716 = vmul.f32 %v711, %v714
    %718 = vrot.lane.b32.xlu0 %v692, 96
    %v719 = vpop.permute.xlu0 %718
    %v721 = vrcp.pop %v719
    %v722 = vmul.f32 %v719, %v721
    %v723 = vsub.f32 1.0, %v722
    %v724 = vmul.f32 %v721, %v723
    %v725 = vadd.f32 %v721, %v724
    %vm726 = vweird.f32 %v719
    %vm727 = vweird.f32 %v721
    %vm728 = vmor %vm726, %vm727
    %v729 = vsel %vm728, %v721, %v725
    %v730 = vand.u32 2147483647, %v719
    %vm731 = vcmp.eq.f32.partialorder %v730, 8.507059e+37
    %v732 = vand.u32 %v719, 2147483648
    %v733 = vor.u32 1.1754944e-38, %v732
    %v734 = vsel %vm731, %v733, %v729
    %v735 = vmul.f32 %v716, %v734
    %v736 = vld [vmem:[#allocation3 + $0x8] sm:$0x3]
    %738 = vrot.lane.b32.xlu0 %v735, 32
    %v739 = vpop.permute.xlu0 %738
    %v740 = vsel %vm81, %v739, 0
    %742 = vmatpush.msra.mxu0 0.0
    %743 = vmatpush.msra.mxu0 0.0
    %744 = vmatpush.msra.mxu0 0.0
    %745 = vmatpush.msra.mxu0 0.0
    %746 = vmatpush.msra.mxu0 0.0
    %747 = vmatpush.msra.mxu0 0.0
    %748 = vmatpush.msra.mxu0 0.0
    %749 = vmatpush.msra.mxu0 0.0
    %750 = vmatpush.msra.mxu0 0.0
    %751 = vmatpush.msra.mxu0 0.0
    %752 = vmatpush.msra.mxu0 0.0
    %753 = vmatpush.msra.mxu0 0.0
    %754 = vmatpush.msra.mxu0 %v310
    %755 = vmatpush.msra.mxu0 %v309
    %756 = vmatpush.msra.mxu0 %v308
    %757 = vmatpush.msra.mxu0 %v307
    %758 = vmatmul.f32.gmra.mxu0 %v740
    %v759 = vpop.f32.mrf.mxu0
    %v760 = vadd.f32 0.0, %v759
    %761 = vdwg.mxu0
    %v762 = vadd.f32 %v736, %v760
    %v763 = vadd.f32 %v762, %v337
    %v764 = vmin.f32 %v763, 0.0
    %v765 = vand.u32 2147483647, %v763
    %v766 = vsub.f32 0.0, %v765
    %v767 = vmul.f32 %v766, 1.442695
    %v768 = vpow.pop %v767
    %v769 = vadd.f32 %v768, 1.0
    %v770 = vlog2.pop %v769
    %v771 = vmul.f32 %v770, 0.6931472
    %v772 = vsub.f32 %v764, %v771
    %774 = vrot.lane.b32.xlu0 %v772, 96
    %v775 = vpop.permute.xlu0 %774
    %v777 = vadd.f32 %v676, %v775
    %v778 = vmax.f32 %v763, %v777
    %v779 = vsub.f32 %v763, %v778
    %v780 = vmul.f32 %v779, 1.442695
    %v781 = vpow.pop %v780
    %v782 = vsub.f32 %v777, %v778
    %v783 = vmul.f32 %v782, 1.442695
    %v784 = vpow.pop %v783
    %v785 = vmul.f32 %v784, %v690
    %v786 = vtanh.pop %v763
    %788 = vrot.lane.b32.xlu0 %v786, 64
    %v789 = vpop.permute.xlu0 %788
    %v791 = vmul.f32 %v781, %v789
    %v792 = vadd.f32 %v785, %v791
    %v793 = vmul.f32 %v784, %v692
    %v794 = vadd.f32 %v793, %v781
    %v795 = vsub.f32 0.0, %v763
    %v796 = vmul.f32 %v795, 1.442695
    %v797 = vpow.pop %v796
    %v798 = vadd.f32 %v797, 1.0
    %v799 = vrcp.pop %v798
    %v800 = vmul.f32 %v798, %v799
    %v801 = vsub.f32 1.0, %v800
    %v802 = vmul.f32 %v799, %v801
    %v803 = vadd.f32 %v799, %v802
    %vm804 = vweird.f32 %v798
    %vm805 = vweird.f32 %v799
    %vm806 = vmor %vm804, %vm805
    %v807 = vsel %vm806, %v799, %v803
    %v808 = vand.u32 2147483647, %v798
    %vm809 = vcmp.eq.f32.partialorder %v808, 8.507059e+37
    %v810 = vand.u32 %v798, 2147483648
    %v811 = vor.u32 1.1754944e-38, %v810
    %v812 = vsel %vm809, %v811, %v807
    %v813 = vmul.f32 1.0, %v812
    %815 = vrot.lane.b32.xlu0 %v792, 96
    %v816 = vpop.permute.xlu0 %815
    %v818 = vmul.f32 %v813, %v816
    %820 = vrot.lane.b32.xlu0 %v794, 96
    %v821 = vpop.permute.xlu0 %820
    %v823 = vrcp.pop %v821
    %v824 = vmul.f32 %v821, %v823
    %v825 = vsub.f32 1.0, %v824
    %v826 = vmul.f32 %v823, %v825
    %v827 = vadd.f32 %v823, %v826
    %vm828 = vweird.f32 %v821
    %vm829 = vweird.f32 %v823
    %vm830 = vmor %vm828, %vm829
    %v831 = vsel %vm830, %v823, %v827
    %v832 = vand.u32 2147483647, %v821
    %vm833 = vcmp.eq.f32.partialorder %v832, 8.507059e+37
    %v834 = vand.u32 %v821, 2147483648
    %v835 = vor.u32 1.1754944e-38, %v834
    %v836 = vsel %vm833, %v835, %v831
    %v837 = vmul.f32 %v818, %v836
    %v838 = vld [vmem:[#allocation3 + $0xa] sm:$0x3]
    %840 = vrot.lane.b32.xlu0 %v837, 32
    %v841 = vpop.permute.xlu0 %840
    %v842 = vsel %vm81, %v841, 0
    %844 = vmatpush.msra.mxu0 0.0
    %845 = vmatpush.msra.mxu0 0.0
    %846 = vmatpush.msra.mxu0 0.0
    %847 = vmatpush.msra.mxu0 0.0
    %848 = vmatpush.msra.mxu0 0.0
    %849 = vmatpush.msra.mxu0 0.0
    %850 = vmatpush.msra.mxu0 0.0
    %851 = vmatpush.msra.mxu0 0.0
    %852 = vmatpush.msra.mxu0 0.0
    %853 = vmatpush.msra.mxu0 0.0
    %854 = vmatpush.msra.mxu0 0.0
    %855 = vmatpush.msra.mxu0 0.0
    %856 = vmatpush.msra.mxu0 %v310
    %857 = vmatpush.msra.mxu0 %v309
    %858 = vmatpush.msra.mxu0 %v308
    %859 = vmatpush.msra.mxu0 %v307
    %860 = vmatmul.f32.gmra.mxu0 %v842
    %v861 = vpop.f32.mrf.mxu0
    %v862 = vadd.f32 0.0, %v861
    %863 = vdwg.mxu0
    %v864 = vadd.f32 %v838, %v862
    %v865 = vadd.f32 %v864, %v337
    %v866 = vmin.f32 %v865, 0.0
    %v867 = vand.u32 2147483647, %v865
    %v868 = vsub.f32 0.0, %v867
    %v869 = vmul.f32 %v868, 1.442695
    %v870 = vpow.pop %v869
    %v871 = vadd.f32 %v870, 1.0
    %v872 = vlog2.pop %v871
    %v873 = vmul.f32 %v872, 0.6931472
    %v874 = vsub.f32 %v866, %v873
    %876 = vrot.lane.b32.xlu0 %v874, 96
    %v877 = vpop.permute.xlu0 %876
    %v879 = vadd.f32 %v778, %v877
    %v880 = vmax.f32 %v865, %v879
    %v881 = vsub.f32 %v865, %v880
    %v882 = vmul.f32 %v881, 1.442695
    %v883 = vpow.pop %v882
    %v884 = vsub.f32 %v879, %v880
    %v885 = vmul.f32 %v884, 1.442695
    %v886 = vpow.pop %v885
    %v887 = vmul.f32 %v886, %v792
    %v888 = vtanh.pop %v865
    %890 = vrot.lane.b32.xlu0 %v888, 64
    %v891 = vpop.permute.xlu0 %890
    %v893 = vmul.f32 %v883, %v891
    %v894 = vadd.f32 %v887, %v893
    %v895 = vmul.f32 %v886, %v794
    %v896 = vadd.f32 %v895, %v883
    %v897 = vsub.f32 0.0, %v865
    %v898 = vmul.f32 %v897, 1.442695
    %v899 = vpow.pop %v898
    %v900 = vadd.f32 %v899, 1.0
    %v901 = vrcp.pop %v900
    %v902 = vmul.f32 %v900, %v901
    %v903 = vsub.f32 1.0, %v902
    %v904 = vmul.f32 %v901, %v903
    %v905 = vadd.f32 %v901, %v904
    %vm906 = vweird.f32 %v900
    %vm907 = vweird.f32 %v901
    %vm908 = vmor %vm906, %vm907
    %v909 = vsel %vm908, %v901, %v905
    %v910 = vand.u32 2147483647, %v900
    %vm911 = vcmp.eq.f32.partialorder %v910, 8.507059e+37
    %v912 = vand.u32 %v900, 2147483648
    %v913 = vor.u32 1.1754944e-38, %v912
    %v914 = vsel %vm911, %v913, %v909
    %v915 = vmul.f32 1.0, %v914
    %917 = vrot.lane.b32.xlu0 %v894, 96
    %v918 = vpop.permute.xlu0 %917
    %v920 = vmul.f32 %v915, %v918
    %922 = vrot.lane.b32.xlu0 %v896, 96
    %v923 = vpop.permute.xlu0 %922
    %v925 = vrcp.pop %v923
    %v926 = vmul.f32 %v923, %v925
    %v927 = vsub.f32 1.0, %v926
    %v928 = vmul.f32 %v925, %v927
    %v929 = vadd.f32 %v925, %v928
    %vm930 = vweird.f32 %v923
    %vm931 = vweird.f32 %v925
    %vm932 = vmor %vm930, %vm931
    %v933 = vsel %vm932, %v925, %v929
    %v934 = vand.u32 2147483647, %v923
    %vm935 = vcmp.eq.f32.partialorder %v934, 8.507059e+37
    %v936 = vand.u32 %v923, 2147483648
    %v937 = vor.u32 1.1754944e-38, %v936
    %v938 = vsel %vm935, %v937, %v933
    %v939 = vmul.f32 %v920, %v938
    %v940 = vld [vmem:[#allocation3 + $0xc] sm:$0x3]
    %942 = vrot.lane.b32.xlu0 %v939, 32
    %v943 = vpop.permute.xlu0 %942
    %v944 = vsel %vm81, %v943, 0
    %946 = vmatpush.msra.mxu0 0.0
    %947 = vmatpush.msra.mxu0 0.0
    %948 = vmatpush.msra.mxu0 0.0
    %949 = vmatpush.msra.mxu0 0.0
    %950 = vmatpush.msra.mxu0 0.0
    %951 = vmatpush.msra.mxu0 0.0
    %952 = vmatpush.msra.mxu0 0.0
    %953 = vmatpush.msra.mxu0 0.0
    %954 = vmatpush.msra.mxu0 0.0
    %955 = vmatpush.msra.mxu0 0.0
    %956 = vmatpush.msra.mxu0 0.0
    %957 = vmatpush.msra.mxu0 0.0
    %958 = vmatpush.msra.mxu0 %v310
    %959 = vmatpush.msra.mxu0 %v309
    %960 = vmatpush.msra.mxu0 %v308
    %961 = vmatpush.msra.mxu0 %v307
    %962 = vmatmul.f32.gmra.mxu0 %v944
    %v963 = vpop.f32.mrf.mxu0
    %v964 = vadd.f32 0.0, %v963
    %965 = vdwg.mxu0
    %v966 = vadd.f32 %v940, %v964
    %v967 = vadd.f32 %v966, %v337
    %v968 = vmin.f32 %v967, 0.0
    %v969 = vand.u32 2147483647, %v967
    %v970 = vsub.f32 0.0, %v969
    %v971 = vmul.f32 %v970, 1.442695
    %v972 = vpow.pop %v971
    %v973 = vadd.f32 %v972, 1.0
    %v974 = vlog2.pop %v973
    %v975 = vmul.f32 %v974, 0.6931472
    %v976 = vsub.f32 %v968, %v975
    %978 = vrot.lane.b32.xlu0 %v976, 96
    %v979 = vpop.permute.xlu0 %978
    %v981 = vadd.f32 %v880, %v979
    %v982 = vmax.f32 %v967, %v981
    %v983 = vsub.f32 %v967, %v982
    %v984 = vmul.f32 %v983, 1.442695
    %v985 = vpow.pop %v984
    %v986 = vsub.f32 %v981, %v982
    %v987 = vmul.f32 %v986, 1.442695
    %v988 = vpow.pop %v987
    %v989 = vmul.f32 %v988, %v894
    %v990 = vtanh.pop %v967
    %992 = vrot.lane.b32.xlu0 %v990, 64
    %v993 = vpop.permute.xlu0 %992
    %v995 = vmul.f32 %v985, %v993
    %v996 = vadd.f32 %v989, %v995
    %v997 = vmul.f32 %v988, %v896
    %v998 = vadd.f32 %v997, %v985
    %v999 = vsub.f32 0.0, %v967
    %v1000 = vmul.f32 %v999, 1.442695
    %v1001 = vpow.pop %v1000
    %v1002 = vadd.f32 %v1001, 1.0
    %v1003 = vrcp.pop %v1002
    %v1004 = vmul.f32 %v1002, %v1003
    %v1005 = vsub.f32 1.0, %v1004
    %v1006 = vmul.f32 %v1003, %v1005
    %v1007 = vadd.f32 %v1003, %v1006
    %vm1008 = vweird.f32 %v1002
    %vm1009 = vweird.f32 %v1003
    %vm1010 = vmor %vm1008, %vm1009
    %v1011 = vsel %vm1010, %v1003, %v1007
    %v1012 = vand.u32 2147483647, %v1002
    %vm1013 = vcmp.eq.f32.partialorder %v1012, 8.507059e+37
    %v1014 = vand.u32 %v1002, 2147483648
    %v1015 = vor.u32 1.1754944e-38, %v1014
    %v1016 = vsel %vm1013, %v1015, %v1011
    %v1017 = vmul.f32 1.0, %v1016
    %1019 = vrot.lane.b32.xlu0 %v996, 96
    %v1020 = vpop.permute.xlu0 %1019
    %v1022 = vmul.f32 %v1017, %v1020
    %1024 = vrot.lane.b32.xlu0 %v998, 96
    %v1025 = vpop.permute.xlu0 %1024
    %v1027 = vrcp.pop %v1025
    %v1028 = vmul.f32 %v1025, %v1027
    %v1029 = vsub.f32 1.0, %v1028
    %v1030 = vmul.f32 %v1027, %v1029
    %v1031 = vadd.f32 %v1027, %v1030
    %vm1032 = vweird.f32 %v1025
    %vm1033 = vweird.f32 %v1027
    %vm1034 = vmor %vm1032, %vm1033
    %v1035 = vsel %vm1034, %v1027, %v1031
    %v1036 = vand.u32 2147483647, %v1025
    %vm1037 = vcmp.eq.f32.partialorder %v1036, 8.507059e+37
    %v1038 = vand.u32 %v1025, 2147483648
    %v1039 = vor.u32 1.1754944e-38, %v1038
    %v1040 = vsel %vm1037, %v1039, %v1035
    %v1041 = vmul.f32 %v1022, %v1040
    %v1042 = vld [vmem:[#allocation3 + $0xe] sm:$0x3]
    %1044 = vrot.lane.b32.xlu0 %v1041, 32
    %v1045 = vpop.permute.xlu0 %1044
    %v1046 = vsel %vm81, %v1045, 0
    %1048 = vmatpush.msra.mxu0 0.0
    %1049 = vmatpush.msra.mxu0 0.0
    %1050 = vmatpush.msra.mxu0 0.0
    %1051 = vmatpush.msra.mxu0 0.0
    %1052 = vmatpush.msra.mxu0 0.0
    %1053 = vmatpush.msra.mxu0 0.0
    %1054 = vmatpush.msra.mxu0 0.0
    %1055 = vmatpush.msra.mxu0 0.0
    %1056 = vmatpush.msra.mxu0 0.0
    %1057 = vmatpush.msra.mxu0 0.0
    %1058 = vmatpush.msra.mxu0 0.0
    %1059 = vmatpush.msra.mxu0 0.0
    %1060 = vmatpush.msra.mxu0 %v310
    %1061 = vmatpush.msra.mxu0 %v309
    %1062 = vmatpush.msra.mxu0 %v308
    %1063 = vmatpush.msra.mxu0 %v307
    %1064 = vmatmul.f32.gmra.mxu0 %v1046
    %v1065 = vpop.f32.mrf.mxu0
    %v1066 = vadd.f32 0.0, %v1065
    %1067 = vdwg.mxu0
    %v1068 = vadd.f32 %v1042, %v1066
    %v1069 = vadd.f32 %v1068, %v337
    %v1070 = vmin.f32 %v1069, 0.0
    %v1071 = vand.u32 2147483647, %v1069
    %v1072 = vsub.f32 0.0, %v1071
    %v1073 = vmul.f32 %v1072, 1.442695
    %v1074 = vpow.pop %v1073
    %v1075 = vadd.f32 %v1074, 1.0
    %v1076 = vlog2.pop %v1075
    %v1077 = vmul.f32 %v1076, 0.6931472
    %v1078 = vsub.f32 %v1070, %v1077
    %1080 = vrot.lane.b32.xlu0 %v1078, 96
    %v1081 = vpop.permute.xlu0 %1080
    %v1083 = vadd.f32 %v982, %v1081
    %v1084 = vmax.f32 %v1069, %v1083
    %v1085 = vsub.f32 %v1069, %v1084
    %v1086 = vmul.f32 %v1085, 1.442695
    %v1087 = vpow.pop %v1086
    %v1088 = vsub.f32 %v1083, %v1084
    %v1089 = vmul.f32 %v1088, 1.442695
    %v1090 = vpow.pop %v1089
    %v1091 = vmul.f32 %v1090, %v996
    %v1092 = vtanh.pop %v1069
    %1094 = vrot.lane.b32.xlu0 %v1092, 64
    %v1095 = vpop.permute.xlu0 %1094
    %v1097 = vmul.f32 %v1087, %v1095
    %v1098 = vadd.f32 %v1091, %v1097
    %v1099 = vmul.f32 %v1090, %v998
    %v1100 = vadd.f32 %v1099, %v1087
    %v1101 = vsub.f32 0.0, %v1069
    %v1102 = vmul.f32 %v1101, 1.442695
    %v1103 = vpow.pop %v1102
    %v1104 = vadd.f32 %v1103, 1.0
    %v1105 = vrcp.pop %v1104
    %v1106 = vmul.f32 %v1104, %v1105
    %v1107 = vsub.f32 1.0, %v1106
    %v1108 = vmul.f32 %v1105, %v1107
    %v1109 = vadd.f32 %v1105, %v1108
    %vm1110 = vweird.f32 %v1104
    %vm1111 = vweird.f32 %v1105
    %vm1112 = vmor %vm1110, %vm1111
    %v1113 = vsel %vm1112, %v1105, %v1109
    %v1114 = vand.u32 2147483647, %v1104
    %vm1115 = vcmp.eq.f32.partialorder %v1114, 8.507059e+37
    %v1116 = vand.u32 %v1104, 2147483648
    %v1117 = vor.u32 1.1754944e-38, %v1116
    %v1118 = vsel %vm1115, %v1117, %v1113
    %v1119 = vmul.f32 1.0, %v1118
    %1121 = vrot.lane.b32.xlu0 %v1098, 96
    %v1122 = vpop.permute.xlu0 %1121
    %v1124 = vmul.f32 %v1119, %v1122
    %1126 = vrot.lane.b32.xlu0 %v1100, 96
    %v1127 = vpop.permute.xlu0 %1126
    %v1129 = vrcp.pop %v1127
    %v1130 = vmul.f32 %v1127, %v1129
    %v1131 = vsub.f32 1.0, %v1130
    %v1132 = vmul.f32 %v1129, %v1131
    %v1133 = vadd.f32 %v1129, %v1132
    %vm1134 = vweird.f32 %v1127
    %vm1135 = vweird.f32 %v1129
    %vm1136 = vmor %vm1134, %vm1135
    %v1137 = vsel %vm1136, %v1129, %v1133
    %v1138 = vand.u32 2147483647, %v1127
    %vm1139 = vcmp.eq.f32.partialorder %v1138, 8.507059e+37
    %v1140 = vand.u32 %v1127, 2147483648
    %v1141 = vor.u32 1.1754944e-38, %v1140
    %v1142 = vsel %vm1139, %v1141, %v1137
    %v1143 = vmul.f32 %v1124, %v1142
    %v1144 = vld [vmem:[#allocation7 + $0xdc] sm:$0x1]
    %1146 = vrot.lane.b32.xlu0 %v1143, 32
    %v1147 = vpop.permute.xlu0 %1146
    %vm1149 = vcmask 254976
    %v1150 = vsel %vm1149, %v1147, 0.0
    %1151 = vadd.xlane.f32.xlu0 %v1150
    %v1152 = vpop.xlane.xlu0 %1151
    %v1153 = vmul.f32 %v1152, %v94
    %v1154 = vsub.f32 %v1143, %v1153
    %v1155 = vmul.f32 %v1154, %v1154
    %1157 = vrot.lane.b32.xlu0 %v1155, 32
    %v1158 = vpop.permute.xlu0 %1157
    %v1160 = vsel %vm1149, %v1158, 0.0
    %1161 = vadd.xlane.f32.xlu0 %v1160
    %v1162 = vpop.xlane.xlu0 %1161
    %v1163 = vmul.f32 %v1162, %v94
    %v1164 = vadd.f32 %v1163, 1e-05
    %v1165 = vrsqrt.pop %v1164
    %v1166 = vmul.f32 %v1165, %v1164
    %v1167 = vmul.f32 %v1166, %v1165
    %v1168 = vmul.f32 0.5, %v1167
    %v1169 = vsub.f32 1.5, %v1168
    %v1170 = vmul.f32 %v1165, %v1169
    %vm1171 = vweird.f32 %v1164
    %vm1172 = vweird.f32 %v1165
    %vm1173 = vmor %vm1171, %vm1172
    %v1174 = vsel %vm1173, %v1165, %v1170
    %v1175 = vmul.f32 %v1154, %v1174
    %v1176 = vperm.slane %v1144, 0
    %1178 = vrot.lane.b32.xlu0 %v1176, 96
    %v1179 = vpop.permute.xlu0 %1178
    %v1181 = vmul.f32 %v1175, %v1179
    %v1183 = vrot.slane %v1181, 2
    %1184 = vrot.lane.b32.xlu0 %v1183, 32
    %v1185 = vpop.permute.xlu0 %1184
    %v1187 = vadd.f32 %v78, %v1185
    %v1188 = vld [vmem:[#allocation7 + $0xdd] sm:$0x1]
    %vm1189 = vcmask 261126
    %v1190 = vsel %vm1189, %v1187, 0.0
    %1191 = vadd.xlane.f32.xlu0 %v1190
    %v1192 = vpop.xlane.xlu0 %1191
    %v1193 = vmul.f32 %v1192, %v94
    %v1194 = vsub.f32 %v1187, %v1193
    %v1195 = vmul.f32 %v1194, %v1194
    %v1196 = vsel %vm1189, %v1195, 0.0
    %1197 = vadd.xlane.f32.xlu0 %v1196
    %v1198 = vpop.xlane.xlu0 %1197
    %v1199 = vmul.f32 %v1198, %v94
    %v1200 = vadd.f32 %v1199, 1e-05
    %v1201 = vrsqrt.pop %v1200
    %v1202 = vmul.f32 %v1201, %v1200
    %v1203 = vmul.f32 %v1202, %v1201
    %v1204 = vmul.f32 0.5, %v1203
    %v1205 = vsub.f32 1.5, %v1204
    %v1206 = vmul.f32 %v1201, %v1205
    %vm1207 = vweird.f32 %v1200
    %vm1208 = vweird.f32 %v1201
    %vm1209 = vmor %vm1207, %vm1208
    %v1210 = vsel %vm1209, %v1201, %v1206
    %v1211 = vmul.f32 %v1194, %v1210
    %v1212 = vperm.slane %v1188, 0
    %v1213 = vmul.f32 %v1211, %v1212
    %v1214 = vld [vmem:[#allocation7 + $0x40] sm:$0xff]
    %v1215 = vld [vmem:[#allocation7 + $0x48] sm:$0xff]
    %v1216 = vld [vmem:[#allocation7 + $0x50] sm:$0xff]
    %v1217 = vld [vmem:[#allocation7 + $0x58] sm:$0xff]
    %v1219 = vrot.slane %v1213, 6
    %v1220 = vsel %vm81, %v1219, 0
    %1222 = vmatpush.msra.mxu0 0.0
    %1223 = vmatpush.msra.mxu0 0.0
    %1224 = vmatpush.msra.mxu0 0.0
    %1225 = vmatpush.msra.mxu0 0.0
    %1226 = vmatpush.msra.mxu0 0.0
    %1227 = vmatpush.msra.mxu0 0.0
    %1228 = vmatpush.msra.mxu0 0.0
    %1229 = vmatpush.msra.mxu0 0.0
    %1230 = vmatpush.msra.mxu0 0.0
    %1231 = vmatpush.msra.mxu0 0.0
    %1232 = vmatpush.msra.mxu0 0.0
    %1233 = vmatpush.msra.mxu0 0.0
    %1234 = vmatpush.msra.mxu0 %v1217
    %1235 = vmatpush.msra.mxu0 %v1216
    %1236 = vmatpush.msra.mxu0 %v1215
    %1237 = vmatpush.msra.mxu0 %v1214
    %1238 = vmatmul.f32.gmra.mxu0 %v1220
    %v1239 = vpop.f32.mrf.mxu0
    %v1240 = vadd.f32 0.0, %v1239
    %1241 = vdwg.mxu0
    %v1242 = vmul.f32 %v1240, %v1240
    %v1243 = vmul.f32 %v1240, %v1242
    %v1244 = vmul.f32 %v1243, 0.044715
    %v1245 = vadd.f32 %v1240, %v1244
    %v1246 = vmul.f32 %v1245, 0.7978846
    %v1247 = vtanh.pop %v1246
    %v1248 = vadd.f32 %v1247, 1.0
    %v1249 = vmul.f32 %v1248, 0.5
    %v1250 = vmul.f32 %v1240, %v1249
    %1252 = vrot.lane.b32.xlu0 %v1240, 64
    %v1253 = vpop.permute.xlu0 %1252
    %v1255 = vmul.f32 %v1250, %v1253
    %v1256 = vld [vmem:[#allocation7 + $0x60] sm:$0xff]
    %v1257 = vld [vmem:[#allocation7 + $0x68] sm:$0xff]
    %v1258 = vld [vmem:[#allocation7 + $0x70] sm:$0xff]
    %v1259 = vld [vmem:[#allocation7 + $0x78] sm:$0xff]
    %v1260 = vld [vmem:[#allocation7 + $0x80] sm:$0xff]
    %v1261 = vld [vmem:[#allocation7 + $0x88] sm:$0xff]
    %v1262 = vld [vmem:[#allocation7 + $0x90] sm:$0xff]
    %v1263 = vld [vmem:[#allocation7 + $0x98] sm:$0xff]
    %v1265 = vsel %vm244, %v1255, 0
    %1267 = vmatpush.msra.mxu0 0.0
    %1268 = vmatpush.msra.mxu0 0.0
    %1269 = vmatpush.msra.mxu0 0.0
    %1270 = vmatpush.msra.mxu0 0.0
    %1271 = vmatpush.msra.mxu0 0.0
    %1272 = vmatpush.msra.mxu0 0.0
    %1273 = vmatpush.msra.mxu0 0.0
    %1274 = vmatpush.msra.mxu0 0.0
    %1275 = vmatpush.msra.mxu0 %v1263
    %1276 = vmatpush.msra.mxu0 %v1262
    %1277 = vmatpush.msra.mxu0 %v1261
    %1278 = vmatpush.msra.mxu0 %v1260
    %1279 = vmatpush.msra.mxu0 %v1259
    %1280 = vmatpush.msra.mxu0 %v1258
    %1281 = vmatpush.msra.mxu0 %v1257
    %1282 = vmatpush.msra.mxu0 %v1256
    %1283 = vmatmul.f32.gmra.mxu0 %v1265
    %v1284 = vpop.f32.mrf.mxu0
    %v1285 = vadd.f32 0.0, %v1284
    %1286 = vdwg.mxu0
    %v1288 = vrot.slane %v1285, 2
    %v1290 = vadd.f32 %v1187, %v1288
    %v1291 = vld [vmem:[#allocation7 + $0xde] sm:$0x1]
    %v1292 = vsel %vm1189, %v1290, 0.0
    %1293 = vadd.xlane.f32.xlu0 %v1292
    %v1294 = vpop.xlane.xlu0 %1293
    %v1295 = vmul.f32 %v1294, %v94
    %v1296 = vsub.f32 %v1290, %v1295
    %v1297 = vmul.f32 %v1296, %v1296
    %v1298 = vsel %vm1189, %v1297, 0.0
    %1299 = vadd.xlane.f32.xlu0 %v1298
    %v1300 = vpop.xlane.xlu0 %1299
    %v1301 = vmul.f32 %v1300, %v94
    %v1302 = vadd.f32 %v1301, 1e-05
    %v1303 = vrsqrt.pop %v1302
    %v1304 = vmul.f32 %v1303, %v1302
    %v1305 = vmul.f32 %v1304, %v1303
    %v1306 = vmul.f32 0.5, %v1305
    %v1307 = vsub.f32 1.5, %v1306
    %v1308 = vmul.f32 %v1303, %v1307
    %vm1309 = vweird.f32 %v1302
    %vm1310 = vweird.f32 %v1303
    %vm1311 = vmor %vm1309, %vm1310
    %v1312 = vsel %vm1311, %v1303, %v1308
    %v1313 = vmul.f32 %v1296, %v1312
    %v1314 = vperm.slane %v1291, 0
    %v1315 = vmul.f32 %v1313, %v1314
    %v1316 = vld [vmem:[#allocation7 + $0xb0] sm:$0xff]
    %v1317 = vld [vmem:[#allocation7 + $0xb8] sm:$0xff]
    %v1318 = vld [vmem:[#allocation7 + $0xc0] sm:$0xff]
    %v1319 = vld [vmem:[#allocation7 + $0xc8] sm:$0xff]
    %v1320 = vld [vmem:[#allocation7 + $0xdf] sm:$0x1]
    %v1321 = vperm.slane %v1320, 0
    %v1323 = vrot.slane %v1315, 6
    %v1324 = vsel %vm81, %v1323, 0
    %1326 = vmatpush.msra.mxu0 0.0
    %1327 = vmatpush.msra.mxu0 0.0
    %1328 = vmatpush.msra.mxu0 0.0
    %1329 = vmatpush.msra.mxu0 0.0
    %1330 = vmatpush.msra.mxu0 0.0
    %1331 = vmatpush.msra.mxu0 0.0
    %1332 = vmatpush.msra.mxu0 0.0
    %1333 = vmatpush.msra.mxu0 0.0
    %1334 = vmatpush.msra.mxu0 0.0
    %1335 = vmatpush.msra.mxu0 0.0
    %1336 = vmatpush.msra.mxu0 0.0
    %1337 = vmatpush.msra.mxu0 0.0
    %1338 = vmatpush.msra.mxu0 %v1319
    %1339 = vmatpush.msra.mxu0 %v1318
    %1340 = vmatpush.msra.mxu0 %v1317
    %1341 = vmatpush.msra.mxu0 %v1316
    %1342 = vmatmul.f32.gmra.mxu0 %v1324
    %v1343 = vpop.f32.mrf.mxu0
    %v1344 = vadd.f32 %v1321, %v1343
    %1345 = vdwg.mxu0
    %vm1346 = vcmask 25600
    %1347 = vst.msk [vmem:[#allocation9] sm:$0x3] %vm1346, %v1344
    // Predicated region
    $region18: #{tpu_custom_call.1} parent=1 // pred_check
      _
    $region19: #{tpu_custom_call.1} parent=1 // pred_check_branch
      %1349 = sbr.rel (0) target = $region21
    $region20: #{tpu_custom_call.1} parent=1 // pred_region
      %1351 = vsyncadd [#allocation6], 0
      %s1353 = sshll.u32 [#allocation9], 4
      %s1354 = int_to_ptr.vmem [resolvable:$true] %s1353
      %s1355 = sshll.u32 %s2, 4
      %s1356 = int_to_ptr.hbm [resolvable:$true] %s1355
      %1358 = dma.vmem_to_hbm [thread:$0]  %s1354, 32, %s1356, [#allocation6]
    $region21: #{tpu_custom_call.1} parent=1 // pred_fallthru
      _
    // Predicated region
    $region22: #{tpu_custom_call.1} parent=1 // pred_check
      _
    $region23: #{tpu_custom_call.1} parent=1 // pred_check_branch
      %1360 = sbr.rel (0) target = $region25
    $region24: #{tpu_custom_call.1} parent=1 // pred_region
      %1362 = dma.done [#allocation6], 32
    $region25: #{tpu_custom_call.1} parent=1 // pred_fallthru
      _
    %1363 = vsyncpa [#allocation5], 1
    %1364 = vsyncpa [#allocation8], 1
    %1365 = vsyncpa [#allocation6], 1

</llo_original>
